<compile_context>
chip_gen: v7x
topology: tpu7x:2x2x1
jax: 0.10.0
libtpu: 0.0.40
codegen_flags: <defaults>
</compile_context>

<pallas_src>
import functools

import jax
import jax.numpy as jnp
from jax.experimental import pallas as pl
from jax.experimental.pallas import tpu as pltpu


def _round_up(x, m):
    return ((x + m - 1) // m) * m


def _build_norm_adj(edge_index, num_nodes, n_pad):
    """Dense row-normalized adjacency (mean aggregation incl. self-loops), f32."""
    src = edge_index[0]
    dst = edge_index[1]
    a = jnp.zeros((n_pad, n_pad), jnp.float32)
    a = a.at[dst, src].add(1.0)                      # message src -> dst
    diag = jnp.arange(num_nodes)
    a = a.at[diag, diag].max(1.0)                    # add_remaining_self_loops
    row_sum = jnp.maximum(jnp.sum(a, axis=1, keepdims=True), 1.0)
    return a / row_sum


def _sagenet2_kernel(x_ref, a_hbm_ref, mask_ref, w_emb_ref, b_emb_ref,
                     w_gcn_ref, b_gcn_ref, w_read_ref, o_ref,
                     a_vmem, a_sem, hg_ref):
    # Single-buffered manual DMA of the bf16 adjacency (no auto double-buffer);
    # overlaps with the embedding matmul below.
    a_copy = pltpu.make_async_copy(a_hbm_ref, a_vmem, a_sem)
    a_copy.start()

    # --- embedding_h: bf16 operands, f32 accumulation on the MXU ---
    h = jnp.dot(x_ref[...].astype(jnp.bfloat16), w_emb_ref[...],
                preferred_element_type=jnp.float32)
    h = h + b_emb_ref[...]                            # bias in f32

    a_copy.wait()
    a = a_vmem[...]                                   # bf16 [N_pad, N_pad]

    # --- stacked SAGEConv layers: ReLU((A @ h) @ W_l + b_l), static unroll ---
    num_layers = w_gcn_ref.shape[0]
    for l in range(num_layers):
        agg = jnp.dot(a, h.astype(jnp.bfloat16),
                      preferred_element_type=jnp.float32)
        h = jnp.dot(agg.astype(jnp.bfloat16), w_gcn_ref[l],
                    preferred_element_type=jnp.float32)
        h = jnp.maximum(h + b_gcn_ref[l], 0.0)        # bias / ReLU stay in f32

    # --- global max pool per graph ---
    # h >= 0 after ReLU, so a multiplicative {0,1} membership mask is exact
    # (no -inf sentinel).  Graphs are processed 8 at a time so each hg store
    # is a full unmasked (8, 128) sublane block.
    g_pad = mask_ref.shape[1]
    for gg in range(g_pad // 8):
        m_blk = mask_ref[:, pl.ds(gg * 8, 8)]          # [N_pad, 8]
        rows = []
        for j in range(8):
            masked = h * m_blk[:, j:j + 1]             # [N_pad, D], VPU mul
            rows.append(jnp.max(masked, axis=0, keepdims=True))
        hg_ref[pl.ds(gg * 8, 8), :] = jnp.concatenate(rows, axis=0)

    # --- readout_mlp (bias-free), kept fully f32; class dim padded to 128 ---
    o_ref[...] = jnp.dot(hg_ref[...], w_read_ref[...],
                         preferred_element_type=jnp.float32).astype(o_ref.dtype)


@functools.partial(jax.jit, static_argnames=("num_graphs", "n_classes"))
def sagenet2_forward(x, edge_index, batch, params, *, num_graphs, n_classes):
    n, d_in = x.shape
    num_layers, d_h, _ = params["w_gcn"].shape
    c_pad = params["w_read"].shape[1]

    # Pad N to a 128 multiple so the A contraction dim fills whole MXU passes.
    n_pad = _round_up(max(n, 128), 128)
    g_pad = _round_up(num_graphs, 8)

    x_pad = x.astype(jnp.float32)
    if n_pad != n:
        x_pad = jnp.pad(x_pad, ((0, n_pad - n), (0, 0)))
        batch = jnp.concatenate(
            [batch, jnp.full((n_pad - n,), -1, dtype=batch.dtype)])

    a_norm = _build_norm_adj(edge_index, n, n_pad).astype(jnp.bfloat16)
    # [N_pad, G_pad] {0,1} membership mask; padded nodes / padded graphs are 0.
    mask = (batch[:, None] ==
            jnp.arange(g_pad, dtype=batch.dtype)[None, :]).astype(jnp.float32)

    flops = (2 * n_pad * d_in * d_in
             + num_layers * (2 * n_pad * n_pad * d_h + 2 * n_pad * d_h * d_h)
             + 2 * g_pad * d_h * c_pad)
    bytes_accessed = (2 * a_norm.size
                      + 4 * (x_pad.size + mask.size + g_pad * c_pad)
                      + 2 * (params["w_emb"].size + params["w_gcn"].size)
                      + 4 * (params["b_emb"].size + params["b_gcn"].size
                             + params["w_read"].size))

    # Explicit VMEM budget: single-buffered bf16 A scratch + double-buffered
    # small operands + headroom (never below 32 MiB so we don't under-cut the
    # compiler's own scratch needs; 32 MiB is <= physical VMEM on v5e/v6e/v7x).
    vmem_needed = (
        2 * n_pad * n_pad                        # bf16 A scratch (1 buffer)
        + 4 * g_pad * d_h                        # pooled hg scratch
        + 2 * (4 * x_pad.size + 4 * mask.size    # double-buffered BlockSpecs
               + 2 * params["w_emb"].size + 4 * params["b_emb"].size
               + 2 * params["w_gcn"].size + 4 * params["b_gcn"].size
               + 4 * params["w_read"].size + 4 * g_pad * c_pad))
    vmem_limit = max(32 << 20, min(vmem_needed + (16 << 20), 100 << 20))

    out = pl.pallas_call(
        _sagenet2_kernel,
        out_shape=jax.ShapeDtypeStruct((g_pad, c_pad), jnp.float32),
        grid_spec=pltpu.PrefetchScalarGridSpec(
            num_scalar_prefetch=0,
            grid=(1,),
            in_specs=[
                pl.BlockSpec((n_pad, d_in), lambda i: (0, 0)),       # x
                pl.BlockSpec(memory_space=pl.ANY),                   # A (HBM)
                pl.BlockSpec((n_pad, g_pad), lambda i: (0, 0)),      # mask
                pl.BlockSpec((d_in, d_in), lambda i: (0, 0)),        # W_emb
                pl.BlockSpec((1, d_in), lambda i: (0, 0)),           # b_emb
                pl.BlockSpec((num_layers, d_h, d_h),
                             lambda i: (0, 0, 0)),                   # W_gcn
                pl.BlockSpec((num_layers, 1, d_h),
                             lambda i: (0, 0, 0)),                   # b_gcn
                pl.BlockSpec((d_h, c_pad), lambda i: (0, 0)),        # W_read
            ],
            out_specs=pl.BlockSpec((g_pad, c_pad), lambda i: (0, 0)),
            scratch_shapes=[
                pltpu.VMEM((n_pad, n_pad), jnp.bfloat16),            # A buffer
                pltpu.SemaphoreType.DMA,                             # A DMA sem
                pltpu.VMEM((g_pad, d_h), jnp.float32),               # pooled hg
            ]),
        compiler_params=pltpu.CompilerParams(
            dimension_semantics=("arbitrary",),
            vmem_limit_bytes=int(vmem_limit)),
        cost_estimate=pl.CostEstimate(flops=int(flops), transcendentals=0,
                                      bytes_accessed=int(bytes_accessed)),
    )(x_pad, a_norm, mask, params["w_emb"], params["b_emb"],
      params["w_gcn"], params["b_gcn"], params["w_read"])

    return out[:num_graphs, :n_classes]


class SAGENet2Pallas:
    """Mirror of SAGENet2 forward with default flags (no BN/residual/concat)."""

    def __init__(self, in_dim=128, hidden_dims=(128, 128, 128, 128),
                 n_classes=10, *, key):
        assert all(h == in_dim for h in hidden_dims), \
            "stacked-weight kernel assumes uniform hidden dims (module default)"
        num_layers = len(hidden_dims)
        keys = jax.random.split(key, 2 + 2 * num_layers + 1)

        bound = 1.0 / (in_dim ** 0.5)

        def u(k, shape):
            return jax.random.uniform(k, shape, jnp.float32, -bound, bound)

        w_emb = u(keys[0], (in_dim, in_dim))                 # [in, out] layout
        b_emb = u(keys[1], (1, in_dim))
        w_gcn = jnp.stack([u(keys[2 + 2 * l], (in_dim, in_dim))
                           for l in range(num_layers)])       # [L, D, D]
        b_gcn = jnp.stack([u(keys[3 + 2 * l], (1, in_dim))
                           for l in range(num_layers)])       # [L, 1, D]
        w_read = u(keys[-1], (in_dim, n_classes))

        # Pad class dim to a multiple of 128 for lane-dense (unmasked) stores.
        c_pad = _round_up(n_classes, 128)
        w_read = jnp.pad(w_read, ((0, 0), (0, c_pad - n_classes)))

        self.n_classes = n_classes
        # Matmul weights stored in bf16 (f32 accumulation in-kernel); biases
        # and the readout weight stay f32.
        self.params = {"w_emb": w_emb.astype(jnp.bfloat16),
                       "b_emb": b_emb,
                       "w_gcn": w_gcn.astype(jnp.bfloat16),
                       "b_gcn": b_gcn,
                       "w_read": w_read}

    def __call__(self, x, edge_index, batch, num_graphs):
        return sagenet2_forward(x, edge_index, batch, self.params,
                                num_graphs=num_graphs, n_classes=self.n_classes)


if __name__ == "__main__":
    key = jax.random.PRNGKey(0)
    k_x, k_e, k_p = jax.random.split(key, 3)

    in_dim = 128
    hidden_dims = (128, 128, 128, 128)
    n_classes = 10
    num_graphs = 2
    nodes_per_graph = 32
    edges_per_graph = 128
    n = num_graphs * nodes_per_graph

    # Deterministic random graph; edges stay inside their own graph.
    src_list, dst_list = [], []
    for g in range(num_graphs):
        ks, kd = jax.random.split(jax.random.fold_in(k_e, g))
        src_list.append(jax.random.randint(
            ks, (edges_per_graph,), 0, nodes_per_graph) + g * nodes_per_graph)
        dst_list.append(jax.random.randint(
            kd, (edges_per_graph,), 0, nodes_per_graph) + g * nodes_per_graph)
    edge_index = jnp.stack([jnp.concatenate(src_list),
                            jnp.concatenate(dst_list)]).astype(jnp.int32)
    batch = jnp.repeat(jnp.arange(num_graphs, dtype=jnp.int32), nodes_per_graph)
    x = jax.random.normal(k_x, (n, in_dim), dtype=jnp.float32)

    model = SAGENet2Pallas(in_dim, hidden_dims, n_classes, key=k_p)
    logits = jax.block_until_ready(model(x, edge_index, batch, num_graphs))
    assert logits.shape == (num_graphs, n_classes), logits.shape

    # Pure-JAX reference of the same math (same bf16-operand / f32-accumulate
    # recipe as the kernel).
    p = model.params
    a_bf = _build_norm_adj(edge_index, n, n).astype(jnp.bfloat16)
    h = jnp.dot(x.astype(jnp.bfloat16), p["w_emb"],
                preferred_element_type=jnp.float32) + p["b_emb"]
    for l in range(p["w_gcn"].shape[0]):
        agg = jnp.dot(a_bf, h.astype(jnp.bfloat16),
                      preferred_element_type=jnp.float32)
        h = jnp.maximum(
            jnp.dot(agg.astype(jnp.bfloat16), p["w_gcn"][l],
                    preferred_element_type=jnp.float32) + p["b_gcn"][l], 0.0)
    hg = []
    for g in range(num_graphs):
        m = (batch == g)[:, None]
        hg.append(jnp.max(jnp.where(m, h, -jnp.inf), axis=0))
    hg = jnp.stack(hg)
    ref = jnp.dot(hg, p["w_read"][:, :n_classes],
                  preferred_element_type=jnp.float32)

    max_err = float(jnp.max(jnp.abs(logits - ref)))
    assert jnp.allclose(logits, ref, atol=2e-2, rtol=2e-2), max_err

    print("KERNEL_OK")
</pallas_src>

<mosaic_0001>
module attributes {stable_mosaic.version = 11 : i64} {
  func.func private @main(%arg0: i32) attributes {dimension_semantics = [#tpu.dimension_semantics<core_parallel>], iteration_bounds = array<i64: 2>, tpu.core_type = #tpu.core_type<sc_scalar_subcore>, window_params = []} {
    return
  }
}

module attributes {stable_mosaic.version = 11 : i64} {
  func.func private @main(%arg0: i32) attributes {dimension_semantics = [#tpu.dimension_semantics<core_parallel>], iteration_bounds = array<i64: 2>, tpu.core_type = #tpu.core_type<sc_scalar_subcore>, window_params = []} {
    return
  }
}

module attributes {stable_mosaic.version = 11 : i64} {
  func.func @_sagenet2_kernel(%arg0: i32, %arg1: memref<128x128xf32, #tpu.memory_space<vmem>>, %arg2: memref<128x128xbf16, #tpu.memory_space<any>>, %arg3: memref<128x8xf32, #tpu.memory_space<vmem>>, %arg4: memref<128x128xbf16, #tpu.memory_space<vmem>>, %arg5: memref<1x128xf32, #tpu.memory_space<vmem>>, %arg6: memref<4x128x128xbf16, #tpu.memory_space<vmem>>, %arg7: memref<4x1x128xf32, #tpu.memory_space<vmem>>, %arg8: memref<128x128xf32, #tpu.memory_space<vmem>>, %arg9: memref<8x128xf32, #tpu.memory_space<vmem>>, %arg10: memref<128x128xbf16, #tpu.memory_space<vmem>>, %arg11: memref<!tpu.dma_semaphore, #tpu.memory_space<semaphore_mem>>, %arg12: memref<8x128xf32, #tpu.memory_space<vmem>>) attributes {dimension_semantics = [#tpu.dimension_semantics<arbitrary>], iteration_bounds = array<i64: 1>, scalar_prefetch = 0 : i64, scratch_operands = 3 : i64, tpu.core_type = #tpu.core_type<tc>, window_params = [{pipeline_mode = #tpu.pipeline_mode<synchronous>, transform_indices = @transform_0, window_bounds = array<i64: 128, 128>}, {}, {pipeline_mode = #tpu.pipeline_mode<synchronous>, transform_indices = @transform_2, window_bounds = array<i64: 128, 8>}, {pipeline_mode = #tpu.pipeline_mode<synchronous>, transform_indices = @transform_3, window_bounds = array<i64: 128, 128>}, {pipeline_mode = #tpu.pipeline_mode<synchronous>, transform_indices = @transform_4, window_bounds = array<i64: 1, 128>}, {pipeline_mode = #tpu.pipeline_mode<synchronous>, transform_indices = @transform_5, window_bounds = array<i64: 4, 128, 128>}, {pipeline_mode = #tpu.pipeline_mode<synchronous>, transform_indices = @transform_6, window_bounds = array<i64: 4, 1, 128>}, {pipeline_mode = #tpu.pipeline_mode<synchronous>, transform_indices = @transform_7, window_bounds = array<i64: 128, 128>}, {pipeline_mode = #tpu.pipeline_mode<synchronous>, transform_indices = @transform_8, window_bounds = array<i64: 8, 128>}]} {
    tpu.enqueue_dma source(%arg2 : memref<128x128xbf16, #tpu.memory_space<any>>) target(%arg10 : memref<128x128xbf16, #tpu.memory_space<vmem>>) target_semaphore(%arg11 : memref<!tpu.dma_semaphore, #tpu.memory_space<semaphore_mem>>)
    %c0 = arith.constant 0 : index
    %c0_0 = arith.constant 0 : index
    %0 = vector.load %arg1[%c0, %c0_0] : memref<128x128xf32, #tpu.memory_space<vmem>>, vector<128x128xf32>
    %1 = arith.truncf %0 : vector<128x128xf32> to vector<128x128xbf16>
    %c0_1 = arith.constant 0 : index
    %c0_2 = arith.constant 0 : index
    %2 = vector.load %arg4[%c0_1, %c0_2] : memref<128x128xbf16, #tpu.memory_space<vmem>>, vector<128x128xbf16>
    %cst = arith.constant dense<0.000000e+00> : vector<128x128xf32>
    %3 = tpu.matmul %1, %2, %cst {dimension_numbers = #tpu.dot_dimension_numbers<[1], [0], [0], [1], [0, 0, 1, 1], [], []>} : vector<128x128xbf16>, vector<128x128xbf16>, vector<128x128xf32> -> vector<128x128xf32>
    %c0_3 = arith.constant 0 : index
    %c0_4 = arith.constant 0 : index
    %4 = vector.load %arg5[%c0_3, %c0_4] : memref<1x128xf32, #tpu.memory_space<vmem>>, vector<1x128xf32>
    %5 = vector.broadcast %4 : vector<1x128xf32> to vector<128x128xf32>
    %6 = arith.addf %3, %5 : vector<128x128xf32>
    tpu.wait_dma2 semaphore(%arg11 : memref<!tpu.dma_semaphore, #tpu.memory_space<semaphore_mem>>) src(%arg2 : memref<128x128xbf16, #tpu.memory_space<any>>) dst(%arg10 : memref<128x128xbf16, #tpu.memory_space<vmem>>)
    %c0_5 = arith.constant 0 : index
    %c0_6 = arith.constant 0 : index
    %7 = vector.load %arg10[%c0_5, %c0_6] : memref<128x128xbf16, #tpu.memory_space<vmem>>, vector<128x128xbf16>
    %8 = arith.truncf %6 : vector<128x128xf32> to vector<128x128xbf16>
    %cst_7 = arith.constant dense<0.000000e+00> : vector<128x128xf32>
    %9 = tpu.matmul %7, %8, %cst_7 {dimension_numbers = #tpu.dot_dimension_numbers<[1], [0], [0], [1], [0, 0, 1, 1], [], []>} : vector<128x128xbf16>, vector<128x128xbf16>, vector<128x128xf32> -> vector<128x128xf32>
    %10 = arith.truncf %9 : vector<128x128xf32> to vector<128x128xbf16>
    %c0_8 = arith.constant 0 : index
    %c0_9 = arith.constant 0 : index
    %c0_10 = arith.constant 0 : index
    %11 = vector.load %arg6[%c0_8, %c0_9, %c0_10] : memref<4x128x128xbf16, #tpu.memory_space<vmem>>, vector<1x128x128xbf16>
    %12 = vector.shape_cast %11 : vector<1x128x128xbf16> to vector<128x128xbf16>
    %cst_11 = arith.constant dense<0.000000e+00> : vector<128x128xf32>
    %13 = tpu.matmul %10, %12, %cst_11 {dimension_numbers = #tpu.dot_dimension_numbers<[1], [0], [0], [1], [0, 0, 1, 1], [], []>} : vector<128x128xbf16>, vector<128x128xbf16>, vector<128x128xf32> -> vector<128x128xf32>
    %c0_12 = arith.constant 0 : index
    %c0_13 = arith.constant 0 : index
    %c0_14 = arith.constant 0 : index
    %14 = vector.load %arg7[%c0_12, %c0_13, %c0_14] : memref<4x1x128xf32, #tpu.memory_space<vmem>>, vector<1x1x128xf32>
    %15 = vector.shape_cast %14 : vector<1x1x128xf32> to vector<1x128xf32>
    %16 = vector.broadcast %15 : vector<1x128xf32> to vector<128x128xf32>
    %17 = arith.addf %13, %16 : vector<128x128xf32>
    %cst_15 = arith.constant 0.000000e+00 : f32
    %18 = vector.broadcast %cst_15 : f32 to vector<128x128xf32>
    %19 = arith.maximumf %17, %18 : vector<128x128xf32>
    %20 = arith.truncf %19 : vector<128x128xf32> to vector<128x128xbf16>
    %cst_16 = arith.constant dense<0.000000e+00> : vector<128x128xf32>
    %21 = tpu.matmul %7, %20, %cst_16 {dimension_numbers = #tpu.dot_dimension_numbers<[1], [0], [0], [1], [0, 0, 1, 1], [], []>} : vector<128x128xbf16>, vector<128x128xbf16>, vector<128x128xf32> -> vector<128x128xf32>
    %22 = arith.truncf %21 : vector<128x128xf32> to vector<128x128xbf16>
    %c1 = arith.constant 1 : index
    %c0_17 = arith.constant 0 : index
    %c0_18 = arith.constant 0 : index
    %23 = vector.load %arg6[%c1, %c0_17, %c0_18] : memref<4x128x128xbf16, #tpu.memory_space<vmem>>, vector<1x128x128xbf16>
    %24 = vector.shape_cast %23 : vector<1x128x128xbf16> to vector<128x128xbf16>
    %cst_19 = arith.constant dense<0.000000e+00> : vector<128x128xf32>
    %25 = tpu.matmul %22, %24, %cst_19 {dimension_numbers = #tpu.dot_dimension_numbers<[1], [0], [0], [1], [0, 0, 1, 1], [], []>} : vector<128x128xbf16>, vector<128x128xbf16>, vector<128x128xf32> -> vector<128x128xf32>
    %c1_20 = arith.constant 1 : index
    %c0_21 = arith.constant 0 : index
    %c0_22 = arith.constant 0 : index
    %26 = vector.load %arg7[%c1_20, %c0_21, %c0_22] : memref<4x1x128xf32, #tpu.memory_space<vmem>>, vector<1x1x128xf32>
    %27 = vector.shape_cast %26 : vector<1x1x128xf32> to vector<1x128xf32>
    %28 = vector.broadcast %27 : vector<1x128xf32> to vector<128x128xf32>
    %29 = arith.addf %25, %28 : vector<128x128xf32>
    %cst_23 = arith.constant 0.000000e+00 : f32
    %30 = vector.broadcast %cst_23 : f32 to vector<128x128xf32>
    %31 = arith.maximumf %29, %30 : vector<128x128xf32>
    %32 = arith.truncf %31 : vector<128x128xf32> to vector<128x128xbf16>
    %cst_24 = arith.constant dense<0.000000e+00> : vector<128x128xf32>
    %33 = tpu.matmul %7, %32, %cst_24 {dimension_numbers = #tpu.dot_dimension_numbers<[1], [0], [0], [1], [0, 0, 1, 1], [], []>} : vector<128x128xbf16>, vector<128x128xbf16>, vector<128x128xf32> -> vector<128x128xf32>
    %34 = arith.truncf %33 : vector<128x128xf32> to vector<128x128xbf16>
    %c2 = arith.constant 2 : index
    %c0_25 = arith.constant 0 : index
    %c0_26 = arith.constant 0 : index
    %35 = vector.load %arg6[%c2, %c0_25, %c0_26] : memref<4x128x128xbf16, #tpu.memory_space<vmem>>, vector<1x128x128xbf16>
    %36 = vector.shape_cast %35 : vector<1x128x128xbf16> to vector<128x128xbf16>
    %cst_27 = arith.constant dense<0.000000e+00> : vector<128x128xf32>
    %37 = tpu.matmul %34, %36, %cst_27 {dimension_numbers = #tpu.dot_dimension_numbers<[1], [0], [0], [1], [0, 0, 1, 1], [], []>} : vector<128x128xbf16>, vector<128x128xbf16>, vector<128x128xf32> -> vector<128x128xf32>
    %c2_28 = arith.constant 2 : index
    %c0_29 = arith.constant 0 : index
    %c0_30 = arith.constant 0 : index
    %38 = vector.load %arg7[%c2_28, %c0_29, %c0_30] : memref<4x1x128xf32, #tpu.memory_space<vmem>>, vector<1x1x128xf32>
    %39 = vector.shape_cast %38 : vector<1x1x128xf32> to vector<1x128xf32>
    %40 = vector.broadcast %39 : vector<1x128xf32> to vector<128x128xf32>
    %41 = arith.addf %37, %40 : vector<128x128xf32>
    %cst_31 = arith.constant 0.000000e+00 : f32
    %42 = vector.broadcast %cst_31 : f32 to vector<128x128xf32>
    %43 = arith.maximumf %41, %42 : vector<128x128xf32>
    %44 = arith.truncf %43 : vector<128x128xf32> to vector<128x128xbf16>
    %cst_32 = arith.constant dense<0.000000e+00> : vector<128x128xf32>
    %45 = tpu.matmul %7, %44, %cst_32 {dimension_numbers = #tpu.dot_dimension_numbers<[1], [0], [0], [1], [0, 0, 1, 1], [], []>} : vector<128x128xbf16>, vector<128x128xbf16>, vector<128x128xf32> -> vector<128x128xf32>
    %46 = arith.truncf %45 : vector<128x128xf32> to vector<128x128xbf16>
    %c3 = arith.constant 3 : index
    %c0_33 = arith.constant 0 : index
    %c0_34 = arith.constant 0 : index
    %47 = vector.load %arg6[%c3, %c0_33, %c0_34] : memref<4x128x128xbf16, #tpu.memory_space<vmem>>, vector<1x128x128xbf16>
    %48 = vector.shape_cast %47 : vector<1x128x128xbf16> to vector<128x128xbf16>
    %cst_35 = arith.constant dense<0.000000e+00> : vector<128x128xf32>
    %49 = tpu.matmul %46, %48, %cst_35 {dimension_numbers = #tpu.dot_dimension_numbers<[1], [0], [0], [1], [0, 0, 1, 1], [], []>} : vector<128x128xbf16>, vector<128x128xbf16>, vector<128x128xf32> -> vector<128x128xf32>
    %c3_36 = arith.constant 3 : index
    %c0_37 = arith.constant 0 : index
    %c0_38 = arith.constant 0 : index
    %50 = vector.load %arg7[%c3_36, %c0_37, %c0_38] : memref<4x1x128xf32, #tpu.memory_space<vmem>>, vector<1x1x128xf32>
    %51 = vector.shape_cast %50 : vector<1x1x128xf32> to vector<1x128xf32>
    %52 = vector.broadcast %51 : vector<1x128xf32> to vector<128x128xf32>
    %53 = arith.addf %49, %52 : vector<128x128xf32>
    %cst_39 = arith.constant 0.000000e+00 : f32
    %54 = vector.broadcast %cst_39 : f32 to vector<128x128xf32>
    %55 = arith.maximumf %53, %54 : vector<128x128xf32>
    %c0_40 = arith.constant 0 : index
    %c0_41 = arith.constant 0 : index
    %56 = vector.load %arg3[%c0_40, %c0_41] : memref<128x8xf32, #tpu.memory_space<vmem>>, vector<128x8xf32>
    %57 = vector.extract_strided_slice %56 {offsets = [0, 0], sizes = [128, 1], strides = [1, 1]} : vector<128x8xf32> to vector<128x1xf32>
    %58 = vector.broadcast %57 : vector<128x1xf32> to vector<128x128xf32>
    %59 = arith.mulf %55, %58 : vector<128x128xf32>
    %cst_42 = arith.constant dense<0xFF800000> : vector<128xf32>
    %60 = vector.multi_reduction <maximumf>, %59, %cst_42 [0] : vector<128x128xf32> to vector<128xf32>
    %61 = vector.shape_cast %60 : vector<128xf32> to vector<1x128xf32>
    %62 = vector.extract_strided_slice %56 {offsets = [0, 1], sizes = [128, 1], strides = [1, 1]} : vector<128x8xf32> to vector<128x1xf32>
    %63 = vector.broadcast %62 : vector<128x1xf32> to vector<128x128xf32>
    %64 = arith.mulf %55, %63 : vector<128x128xf32>
    %cst_43 = arith.constant dense<0xFF800000> : vector<128xf32>
    %65 = vector.multi_reduction <maximumf>, %64, %cst_43 [0] : vector<128x128xf32> to vector<128xf32>
    %66 = vector.shape_cast %65 : vector<128xf32> to vector<1x128xf32>
    %67 = vector.extract_strided_slice %56 {offsets = [0, 2], sizes = [128, 1], strides = [1, 1]} : vector<128x8xf32> to vector<128x1xf32>
    %68 = vector.broadcast %67 : vector<128x1xf32> to vector<128x128xf32>
    %69 = arith.mulf %55, %68 : vector<128x128xf32>
    %cst_44 = arith.constant dense<0xFF800000> : vector<128xf32>
    %70 = vector.multi_reduction <maximumf>, %69, %cst_44 [0] : vector<128x128xf32> to vector<128xf32>
    %71 = vector.shape_cast %70 : vector<128xf32> to vector<1x128xf32>
    %72 = vector.extract_strided_slice %56 {offsets = [0, 3], sizes = [128, 1], strides = [1, 1]} : vector<128x8xf32> to vector<128x1xf32>
    %73 = vector.broadcast %72 : vector<128x1xf32> to vector<128x128xf32>
    %74 = arith.mulf %55, %73 : vector<128x128xf32>
    %cst_45 = arith.constant dense<0xFF800000> : vector<128xf32>
    %75 = vector.multi_reduction <maximumf>, %74, %cst_45 [0] : vector<128x128xf32> to vector<128xf32>
    %76 = vector.shape_cast %75 : vector<128xf32> to vector<1x128xf32>
    %77 = vector.extract_strided_slice %56 {offsets = [0, 4], sizes = [128, 1], strides = [1, 1]} : vector<128x8xf32> to vector<128x1xf32>
    %78 = vector.broadcast %77 : vector<128x1xf32> to vector<128x128xf32>
    %79 = arith.mulf %55, %78 : vector<128x128xf32>
    %cst_46 = arith.constant dense<0xFF800000> : vector<128xf32>
    %80 = vector.multi_reduction <maximumf>, %79, %cst_46 [0] : vector<128x128xf32> to vector<128xf32>
    %81 = vector.shape_cast %80 : vector<128xf32> to vector<1x128xf32>
    %82 = vector.extract_strided_slice %56 {offsets = [0, 5], sizes = [128, 1], strides = [1, 1]} : vector<128x8xf32> to vector<128x1xf32>
    %83 = vector.broadcast %82 : vector<128x1xf32> to vector<128x128xf32>
    %84 = arith.mulf %55, %83 : vector<128x128xf32>
    %cst_47 = arith.constant dense<0xFF800000> : vector<128xf32>
    %85 = vector.multi_reduction <maximumf>, %84, %cst_47 [0] : vector<128x128xf32> to vector<128xf32>
    %86 = vector.shape_cast %85 : vector<128xf32> to vector<1x128xf32>
    %87 = vector.extract_strided_slice %56 {offsets = [0, 6], sizes = [128, 1], strides = [1, 1]} : vector<128x8xf32> to vector<128x1xf32>
    %88 = vector.broadcast %87 : vector<128x1xf32> to vector<128x128xf32>
    %89 = arith.mulf %55, %88 : vector<128x128xf32>
    %cst_48 = arith.constant dense<0xFF800000> : vector<128xf32>
    %90 = vector.multi_reduction <maximumf>, %89, %cst_48 [0] : vector<128x128xf32> to vector<128xf32>
    %91 = vector.shape_cast %90 : vector<128xf32> to vector<1x128xf32>
    %92 = vector.extract_strided_slice %56 {offsets = [0, 7], sizes = [128, 1], strides = [1, 1]} : vector<128x8xf32> to vector<128x1xf32>
    %93 = vector.broadcast %92 : vector<128x1xf32> to vector<128x128xf32>
    %94 = arith.mulf %55, %93 : vector<128x128xf32>
    %cst_49 = arith.constant dense<0xFF800000> : vector<128xf32>
    %95 = vector.multi_reduction <maximumf>, %94, %cst_49 [0] : vector<128x128xf32> to vector<128xf32>
    %96 = vector.shape_cast %95 : vector<128xf32> to vector<1x128xf32>
    %97 = tpu.concatenate %61, %66, %71, %76, %81, %86, %91, %96 in 0 : vector<1x128xf32>, vector<1x128xf32>, vector<1x128xf32>, vector<1x128xf32>, vector<1x128xf32>, vector<1x128xf32>, vector<1x128xf32>, vector<1x128xf32> -> vector<8x128xf32>
    %c0_50 = arith.constant 0 : index
    %c0_51 = arith.constant 0 : index
    %98 = vector.load %arg12[%c0_50, %c0_51] : memref<8x128xf32, #tpu.memory_space<vmem>>, vector<8x128xf32>
    tpu.vector_store %arg12[%c0_50, %c0_51], %97 {strides = array<i32>} : memref<8x128xf32, #tpu.memory_space<vmem>>, vector<8x128xf32>,
    %c0_52 = arith.constant 0 : index
    %c0_53 = arith.constant 0 : index
    %99 = vector.load %arg12[%c0_52, %c0_53] : memref<8x128xf32, #tpu.memory_space<vmem>>, vector<8x128xf32>
    %c0_54 = arith.constant 0 : index
    %c0_55 = arith.constant 0 : index
    %100 = vector.load %arg8[%c0_54, %c0_55] : memref<128x128xf32, #tpu.memory_space<vmem>>, vector<128x128xf32>
    %cst_56 = arith.constant dense<0.000000e+00> : vector<8x128xf32>
    %101 = tpu.matmul %99, %100, %cst_56 {dimension_numbers = #tpu.dot_dimension_numbers<[1], [0], [0], [1], [0, 0, 1, 1], [], []>} : vector<8x128xf32>, vector<128x128xf32>, vector<8x128xf32> -> vector<8x128xf32>
    %c0_57 = arith.constant 0 : index
    %c0_58 = arith.constant 0 : index
    %102 = vector.load %arg9[%c0_57, %c0_58] : memref<8x128xf32, #tpu.memory_space<vmem>>, vector<8x128xf32>
    tpu.vector_store %arg9[%c0_57, %c0_58], %101 {strides = array<i32>} : memref<8x128xf32, #tpu.memory_space<vmem>>, vector<8x128xf32>,
    return
  }
  func.func @transform_0(%arg0: i32) -> (i32, i32) {
    %c0_i32 = arith.constant 0 : i32
    %c0_i32_0 = arith.constant 0 : i32
    %c0_i32_1 = arith.constant 0 : i32
    return %c0_i32, %c0_i32_0 : i32, i32
  }
  func.func @transform_2(%arg0: i32) -> (i32, i32) {
    %c0_i32 = arith.constant 0 : i32
    %c0_i32_0 = arith.constant 0 : i32
    %c0_i32_1 = arith.constant 0 : i32
    return %c0_i32, %c0_i32_0 : i32, i32
  }
  func.func @transform_3(%arg0: i32) -> (i32, i32) {
    %c0_i32 = arith.constant 0 : i32
    %c0_i32_0 = arith.constant 0 : i32
    %c0_i32_1 = arith.constant 0 : i32
    return %c0_i32, %c0_i32_0 : i32, i32
  }
  func.func @transform_4(%arg0: i32) -> (i32, i32) {
    %c0_i32 = arith.constant 0 : i32
    %c0_i32_0 = arith.constant 0 : i32
    %c0_i32_1 = arith.constant 0 : i32
    return %c0_i32, %c0_i32_0 : i32, i32
  }
  func.func @transform_5(%arg0: i32) -> (i32, i32, i32) {
    %c0_i32 = arith.constant 0 : i32
    %c0_i32_0 = arith.constant 0 : i32
    %c0_i32_1 = arith.constant 0 : i32
    %c0_i32_2 = arith.constant 0 : i32
    return %c0_i32, %c0_i32_0, %c0_i32_1 : i32, i32, i32
  }
  func.func @transform_6(%arg0: i32) -> (i32, i32, i32) {
    %c0_i32 = arith.constant 0 : i32
    %c0_i32_0 = arith.constant 0 : i32
    %c0_i32_1 = arith.constant 0 : i32
    %c0_i32_2 = arith.constant 0 : i32
    return %c0_i32, %c0_i32_0, %c0_i32_1 : i32, i32, i32
  }
  func.func @transform_7(%arg0: i32) -> (i32, i32) {
    %c0_i32 = arith.constant 0 : i32
    %c0_i32_0 = arith.constant 0 : i32
    %c0_i32_1 = arith.constant 0 : i32
    return %c0_i32, %c0_i32_0 : i32, i32
  }
  func.func @transform_8(%arg0: i32) -> (i32, i32) {
    %c0_i32 = arith.constant 0 : i32
    %c0_i32_0 = arith.constant 0 : i32
    %c0_i32_1 = arith.constant 0 : i32
    return %c0_i32, %c0_i32_0 : i32, i32
  }
}

</mosaic_0001>

<llo_original>
// kernel: sagenet2_forward.1
$region0: #{sagenet2_forward.1}
  #allocation0 [shape = 'u32[]', space=smem, size = 0x4, offset = 0x4, fixed_abs, tag = 'smem constant byte address 0x4 - core index']
  #allocation1 [shape = 'u32[144,128]{1,0:T(1,128)}', space=vmem, size = 0x12000, scoped, tag = 'internal scratch']
  #allocation2 [shape = 'bf16[128,128]{1,0:T(16,128)(2,1)}', space=vmem, size = 0x8000, scoped, tag = 'scratch operand']
  #allocation3 [shape = 's32[1]{0}', space=sflag, size = 0x4, scoped, tag = 'scratch operand']
  #allocation4 [shape = 'f32[8,128]{1,0:T(8,128)}', space=vmem, size = 0x1000, scoped, tag = 'scratch operand']
  #allocation5 [shape = 's32[]', space=sflag, size = 0x4, offset = 0, fixed_abs, tag = 'sflag constant byte address 0x0 - dummy sync flag']
  %s0 = inlined_call_operand.vmem [shape: f32[128,128], index: 0, kind: input, shape index: {}]
  %s1 = inlined_call_operand.vmem [shape: bf16[128,128], index: 1, kind: input, shape index: {}]
  %s2 = inlined_call_operand.vmem [shape: f32[128,8], index: 2, kind: input, shape index: {}]
  %s3 = inlined_call_operand.vmem [shape: bf16[128,128], index: 3, kind: input, shape index: {}]
  %s4 = inlined_call_operand.vmem [shape: f32[1,128], index: 4, kind: input, shape index: {}]
  %s5 = inlined_call_operand.vmem [shape: bf16[4,128,128], index: 5, kind: input, shape index: {}]
  %s6 = inlined_call_operand.vmem [shape: f32[4,1,128], index: 6, kind: input, shape index: {}]
  %s7 = inlined_call_operand.vmem [shape: f32[128,128], index: 7, kind: input, shape index: {}]
  %s8 = inlined_call_operand.vmem [shape: f32[8,128], index: 8, kind: output, shape index: {}]
  %s9 = sld [smem:[#allocation0]]
  $region72: #{sagenet2_forward.1} parent=0
    _
  %s11 = ssub.s32 1, %s9
  %s12 = scalar_select 0, %s11, %s9
  // Predicated region
  $region2: #{sagenet2_forward.1} parent=0 // pred_check
    _
  $region3: #{sagenet2_forward.1} parent=0 // pred_check_branch
    %14 = sbr.rel (0) target = $region5
  $region4: #{sagenet2_forward.1} parent=0 // pred_region
    _
  $region5: #{sagenet2_forward.1} parent=0 // pred_fallthru
    _
  // Predicated region
  $region6: #{sagenet2_forward.1} parent=0 // pred_check
    _
  $region7: #{sagenet2_forward.1} parent=0 // pred_check_branch
    %16 = sbr.rel (0) target = $region9
  $region8: #{sagenet2_forward.1} parent=0 // pred_region
    _
  $region9: #{sagenet2_forward.1} parent=0 // pred_fallthru
    _
  // Predicated region
  $region10: #{sagenet2_forward.1} parent=0 // pred_check
    _
  $region11: #{sagenet2_forward.1} parent=0 // pred_check_branch
    %18 = sbr.rel (0) target = $region13
  $region12: #{sagenet2_forward.1} parent=0 // pred_region
    _
  $region13: #{sagenet2_forward.1} parent=0 // pred_fallthru
    _
  // Predicated region
  $region14: #{sagenet2_forward.1} parent=0 // pred_check
    _
  $region15: #{sagenet2_forward.1} parent=0 // pred_check_branch
    %20 = sbr.rel (0) target = $region17
  $region16: #{sagenet2_forward.1} parent=0 // pred_region
    _
  $region17: #{sagenet2_forward.1} parent=0 // pred_fallthru
    _
  // Predicated region
  $region18: #{sagenet2_forward.1} parent=0 // pred_check
    _
  $region19: #{sagenet2_forward.1} parent=0 // pred_check_branch
    %22 = sbr.rel (0) target = $region21
  $region20: #{sagenet2_forward.1} parent=0 // pred_region
    _
  $region21: #{sagenet2_forward.1} parent=0 // pred_fallthru
    _
  // Predicated region
  $region22: #{sagenet2_forward.1} parent=0 // pred_check
    _
  $region23: #{sagenet2_forward.1} parent=0 // pred_check_branch
    %24 = sbr.rel (0) target = $region25
  $region24: #{sagenet2_forward.1} parent=0 // pred_region
    _
  $region25: #{sagenet2_forward.1} parent=0 // pred_fallthru
    _
  // Predicated region
  $region26: #{sagenet2_forward.1} parent=0 // pred_check
    _
  $region27: #{sagenet2_forward.1} parent=0 // pred_check_branch
    %26 = sbr.rel (0) target = $region29
  $region28: #{sagenet2_forward.1} parent=0 // pred_region
    _
  $region29: #{sagenet2_forward.1} parent=0 // pred_fallthru
    _
  %p29 = scmp.lt.u32.totalorder 64, 8
  %p30 = pneg %p29
  // Predicated region
  $region30: #{sagenet2_forward.1} parent=0 // pred_check
    _
  $region31: #{sagenet2_forward.1} parent=0 // pred_check_branch
    %32 = sbr.rel (%p29) target = $region33
  $region32: #{sagenet2_forward.1} parent=0 // pred_region
    %s47 = sand.u32 64, 7
    %p48 = scmp.eq.s32.totalorder %s47, 0
    // Predicated region
    $region45: #{sagenet2_forward.1} parent=32 // pred_check
      %p49 = pneg %p48
    $region46: #{sagenet2_forward.1} parent=32 // pred_check_branch
      %51 = sbr.rel (%p49) target = $region48
    $region47: #{sagenet2_forward.1} parent=32 // pred_region
      loop: start=0, step=1, limit=1
      $region49: #{sagenet2_forward.1} parent=47 // loop_pre_header
        _
      $region50: #{sagenet2_forward.1} parent=47 // loop_header
        %s53 = sphi 0, %s57
        %p54 = scmp.ge.s32.totalorder %s53, 1
        %s58 = sphi %s1, %s1
        %s59 = sphi [#allocation2], [#allocation2]
      $region51: #{sagenet2_forward.1} parent=47 // loop_header_branch
        %56 = sbr.rel (%p54) target = $region55
      $region52: #{sagenet2_forward.1} parent=47 // loop_body
        %v60 = vld [vmem:[%s58] sm:$0xff]
        %61 = vst [vmem:[%s59] sm:$0xff] %v60
        %v62 = vld [vmem:[%s58 + $0x8] sm:$0xff]
        %63 = vst [vmem:[%s59 + $0x8] sm:$0xff] %v62
        %v64 = vld [vmem:[%s58 + $0x10] sm:$0xff]
        %65 = vst [vmem:[%s59 + $0x10] sm:$0xff] %v64
        %v66 = vld [vmem:[%s58 + $0x18] sm:$0xff]
        %67 = vst [vmem:[%s59 + $0x18] sm:$0xff] %v66
        %v68 = vld [vmem:[%s58 + $0x20] sm:$0xff]
        %69 = vst [vmem:[%s59 + $0x20] sm:$0xff] %v68
        %v70 = vld [vmem:[%s58 + $0x28] sm:$0xff]
        %71 = vst [vmem:[%s59 + $0x28] sm:$0xff] %v70
        %v72 = vld [vmem:[%s58 + $0x30] sm:$0xff]
        %73 = vst [vmem:[%s59 + $0x30] sm:$0xff] %v72
        %v74 = vld [vmem:[%s58 + $0x38] sm:$0xff]
        %75 = vst [vmem:[%s59 + $0x38] sm:$0xff] %v74
      $region53: #{sagenet2_forward.1} parent=47 // loop_footer
        %s57 = sadd.s32 1, %s53
      $region54: #{sagenet2_forward.1} parent=47 // loop_footer_branch
        %52 = sbr.rel target = $region50
      $region55: #{sagenet2_forward.1} parent=47 // loop_exit
        _
    $region48: #{sagenet2_forward.1} parent=32 // pred_fallthru
      _
    %p76 = pneg %p48
    // Predicated region
    $region56: #{sagenet2_forward.1} parent=32 // pred_check
      _
    $region57: #{sagenet2_forward.1} parent=32 // pred_check_branch
      %78 = sbr.rel (%p48) target = $region59
    $region58: #{sagenet2_forward.1} parent=32 // pred_region
      %s79 = sand.u32 64, 7
    $region59: #{sagenet2_forward.1} parent=32 // pred_fallthru
      _
  $region33: #{sagenet2_forward.1} parent=0 // pred_fallthru
    _
  // Predicated region
  $region34: #{sagenet2_forward.1} parent=0 // pred_check
    %p33 = pneg %p29
  $region35: #{sagenet2_forward.1} parent=0 // pred_check_branch
    %35 = sbr.rel (%p33) target = $region37
  $region36: #{sagenet2_forward.1} parent=0 // pred_region
    %s36 = sshllo.u32 0, 64
    loop: start=0, step=1, limit=1
    $region38: #{sagenet2_forward.1} parent=36 // loop_pre_header
      _
    $region39: #{sagenet2_forward.1} parent=36 // loop_header
      %s38 = sphi 0, %s42
      %p39 = scmp.ge.s32.totalorder %s38, 1
      %s43 = sphi %s1, %s1
      %s44 = sphi [#allocation2], [#allocation2]
    $region40: #{sagenet2_forward.1} parent=36 // loop_header_branch
      %41 = sbr.rel (%p39) target = $region44
    $region41: #{sagenet2_forward.1} parent=36 // loop_body
      %v45 = vld [vmem:[%s43] sm:%s36]
      %46 = vst [vmem:[%s44] sm:%s36] %v45
    $region42: #{sagenet2_forward.1} parent=36 // loop_footer
      %s42 = sadd.s32 1, %s38
    $region43: #{sagenet2_forward.1} parent=36 // loop_footer_branch
      %37 = sbr.rel target = $region39
    $region44: #{sagenet2_forward.1} parent=36 // loop_exit
      _
  $region37: #{sagenet2_forward.1} parent=0 // pred_fallthru
    _
  // Predicated region
  $region60: #{sagenet2_forward.1} parent=0 // pred_check
    _
  $region61: #{sagenet2_forward.1} parent=0 // pred_check_branch
    %82 = sbr.rel (0) target = $region63
  $region62: #{sagenet2_forward.1} parent=0 // pred_region
    %83 = vsyncadd [#allocation3], 1024
  $region63: #{sagenet2_forward.1} parent=0 // pred_fallthru
    _
  %v84 = vld [vmem:[%s0] sm:$0xff]
  %v85 = vld [vmem:[%s0 + $0x8] sm:$0xff]
  %v86 = vld [vmem:[%s0 + $0x10] sm:$0xff]
  %v87 = vld [vmem:[%s0 + $0x18] sm:$0xff]
  %v88 = vld [vmem:[%s0 + $0x20] sm:$0xff]
  %v89 = vld [vmem:[%s0 + $0x28] sm:$0xff]
  %v90 = vld [vmem:[%s0 + $0x30] sm:$0xff]
  %v91 = vld [vmem:[%s0 + $0x38] sm:$0xff]
  %v92 = vld [vmem:[%s0 + $0x40] sm:$0xff]
  %v93 = vld [vmem:[%s0 + $0x48] sm:$0xff]
  %v94 = vld [vmem:[%s0 + $0x50] sm:$0xff]
  %v95 = vld [vmem:[%s0 + $0x58] sm:$0xff]
  %v96 = vld [vmem:[%s0 + $0x60] sm:$0xff]
  %v97 = vld [vmem:[%s0 + $0x68] sm:$0xff]
  %v98 = vld [vmem:[%s0 + $0x70] sm:$0xff]
  %v99 = vld [vmem:[%s0 + $0x78] sm:$0xff]
  %v100 = vpack.c.bf16 %v85, %v84
  %v101 = vpack.c.bf16 %v87, %v86
  %v102 = vpack.c.bf16 %v89, %v88
  %v103 = vpack.c.bf16 %v91, %v90
  %v104 = vpack.c.bf16 %v93, %v92
  %v105 = vpack.c.bf16 %v95, %v94
  %v106 = vpack.c.bf16 %v97, %v96
  %v107 = vpack.c.bf16 %v99, %v98
  %v108 = vld [vmem:[%s3] sm:$0xf]
  %v109 = vld [vmem:[%s3 + $0x4] sm:$0xf]
  %v110 = vld [vmem:[%s3 + $0x8] sm:$0xf]
  %v111 = vld [vmem:[%s3 + $0xc] sm:$0xf]
  %v112 = vld [vmem:[%s3 + $0x10] sm:$0xf]
  %v113 = vld [vmem:[%s3 + $0x14] sm:$0xf]
  %v114 = vld [vmem:[%s3 + $0x18] sm:$0xf]
  %v115 = vld [vmem:[%s3 + $0x1c] sm:$0xf]
  %v116 = vld [vmem:[%s3 + $0x20] sm:$0xf]
  %v117 = vld [vmem:[%s3 + $0x24] sm:$0xf]
  %v118 = vld [vmem:[%s3 + $0x28] sm:$0xf]
  %v119 = vld [vmem:[%s3 + $0x2c] sm:$0xf]
  %v120 = vld [vmem:[%s3 + $0x30] sm:$0xf]
  %v121 = vld [vmem:[%s3 + $0x34] sm:$0xf]
  %v122 = vld [vmem:[%s3 + $0x38] sm:$0xf]
  %v123 = vld [vmem:[%s3 + $0x3c] sm:$0xf]
  %v124 = vld [vmem:[%s4] sm:$0x1]
  %v126 = vlaneseq
  %v127 = vshrl.u32 %v126, 7
  %v128 = vsub.s32 0, %v127
  %v129 = vrot.slane %v124, %v128
  %v147 = vunpack.c.l.b16 %v108
  %v148 = vunpack.c.l.b16 %v109
  %v149 = vunpack.c.l.b16 %v110
  %v150 = vunpack.c.l.b16 %v111
  %v151 = vunpack.c.l.b16 %v112
  %v152 = vunpack.c.l.b16 %v113
  %v153 = vunpack.c.l.b16 %v114
  %v154 = vunpack.c.l.b16 %v115
  %v155 = vunpack.c.l.b16 %v116
  %v156 = vunpack.c.l.b16 %v117
  %v157 = vunpack.c.l.b16 %v118
  %v158 = vunpack.c.l.b16 %v119
  %v159 = vunpack.c.l.b16 %v120
  %v160 = vunpack.c.l.b16 %v121
  %v161 = vunpack.c.l.b16 %v122
  %v162 = vunpack.c.l.b16 %v123
  %v163 = vpack.c.b16 %v148, %v147
  %v164 = vpack.c.b16 %v150, %v149
  %v165 = vpack.c.b16 %v152, %v151
  %v166 = vpack.c.b16 %v154, %v153
  %v167 = vpack.c.b16 %v156, %v155
  %v168 = vpack.c.b16 %v158, %v157
  %v169 = vpack.c.b16 %v160, %v159
  %v170 = vpack.c.b16 %v162, %v161
  %179 = vmatprep.subr.bf16.mxu0 0
  %180 = vmatpush1.bf16.msra.mxu0 %v163
  %181 = vmatprep.subr.bf16.mxu0 0
  %182 = vmatpush1.bf16.msra.mxu0 %v164
  %183 = vmatprep.subr.bf16.mxu0 0
  %184 = vmatpush1.bf16.msra.mxu0 %v165
  %185 = vmatprep.subr.bf16.mxu0 0
  %186 = vmatpush1.bf16.msra.mxu0 %v166
  %187 = vmatprep.subr.bf16.mxu0 0
  %188 = vmatpush1.bf16.msra.mxu0 %v167
  %189 = vmatprep.subr.bf16.mxu0 0
  %190 = vmatpush1.bf16.msra.mxu0 %v168
  %191 = vmatprep.subr.bf16.mxu0 0
  %192 = vmatpush1.bf16.msra.mxu0 %v169
  %193 = vmatprep.subr.bf16.mxu0 0
  %194 = vmatpush1.bf16.msra.mxu0 %v170
  %195 = vmatprep.subr.bf16.mxu0 0
  %196 = vmatpush1.bf16.msra.mxu0 0
  %197 = vmatprep.subr.bf16.mxu0 0
  %198 = vmatpush1.bf16.msra.mxu0 0
  %199 = vmatprep.subr.bf16.mxu0 0
  %200 = vmatpush1.bf16.msra.mxu0 0
  %201 = vmatprep.subr.bf16.mxu0 0
  %202 = vmatpush1.bf16.msra.mxu0 0
  %203 = vmatprep.subr.bf16.mxu0 0
  %204 = vmatpush1.bf16.msra.mxu0 0
  %205 = vmatprep.subr.bf16.mxu0 0
  %206 = vmatpush1.bf16.msra.mxu0 0
  %207 = vmatprep.subr.bf16.mxu0 0
  %208 = vmatpush1.bf16.msra.mxu0 0
  %209 = vmatprep.subr.bf16.mxu0 0
  %210 = vmatpush1.bf16.msra.mxu0 0
  %211 = vmatprep.mubr.bf16.mxu0 0
  %212 = vmatmul.mubr.bf16.gmra.mrb[0].mxu0 %v100
  %v213 = vpop.f32.mrb[0].mxu0
  %v214 = vadd.f32 %v129, %v213
  %v215 = vpop.f32.mrb[0].mxu0
  %v216 = vpop.f32.mrb[0].mxu0
  %v217 = vadd.f32 %v129, %v216
  %v218 = vpop.f32.mrb[0].mxu0
  %219 = vmatprep.mubr.bf16.mxu0 0
  %220 = vmatmul.mubr.bf16.gmra.mrb[0].mxu0 %v101
  %v221 = vpop.f32.mrb[0].mxu0
  %v222 = vadd.f32 %v129, %v221
  %v223 = vpop.f32.mrb[0].mxu0
  %v224 = vpop.f32.mrb[0].mxu0
  %v225 = vadd.f32 %v129, %v224
  %v226 = vpop.f32.mrb[0].mxu0
  %227 = vmatprep.mubr.bf16.mxu0 0
  %228 = vmatmul.mubr.bf16.gmra.mrb[0].mxu0 %v102
  %v229 = vpop.f32.mrb[0].mxu0
  %v230 = vadd.f32 %v129, %v229
  %v231 = vpop.f32.mrb[0].mxu0
  %v232 = vpop.f32.mrb[0].mxu0
  %v233 = vadd.f32 %v129, %v232
  %v234 = vpop.f32.mrb[0].mxu0
  %235 = vmatprep.mubr.bf16.mxu0 0
  %236 = vmatmul.mubr.bf16.gmra.mrb[0].mxu0 %v103
  %v237 = vpop.f32.mrb[0].mxu0
  %v238 = vadd.f32 %v129, %v237
  %v239 = vpop.f32.mrb[0].mxu0
  %v240 = vpop.f32.mrb[0].mxu0
  %v241 = vadd.f32 %v129, %v240
  %v242 = vpop.f32.mrb[0].mxu0
  %243 = vmatprep.mubr.bf16.mxu0 0
  %244 = vmatmul.mubr.bf16.gmra.mrb[0].mxu0 %v104
  %v245 = vpop.f32.mrb[0].mxu0
  %v246 = vadd.f32 %v129, %v245
  %v247 = vpop.f32.mrb[0].mxu0
  %v248 = vpop.f32.mrb[0].mxu0
  %v249 = vadd.f32 %v129, %v248
  %v250 = vpop.f32.mrb[0].mxu0
  %251 = vmatprep.mubr.bf16.mxu0 0
  %252 = vmatmul.mubr.bf16.gmra.mrb[0].mxu0 %v105
  %v253 = vpop.f32.mrb[0].mxu0
  %v254 = vadd.f32 %v129, %v253
  %v255 = vpop.f32.mrb[0].mxu0
  %v256 = vpop.f32.mrb[0].mxu0
  %v257 = vadd.f32 %v129, %v256
  %v258 = vpop.f32.mrb[0].mxu0
  %259 = vmatprep.mubr.bf16.mxu0 0
  %260 = vmatmul.mubr.bf16.gmra.mrb[0].mxu0 %v106
  %v261 = vpop.f32.mrb[0].mxu0
  %v262 = vadd.f32 %v129, %v261
  %v263 = vpop.f32.mrb[0].mxu0
  %v264 = vpop.f32.mrb[0].mxu0
  %v265 = vadd.f32 %v129, %v264
  %v266 = vpop.f32.mrb[0].mxu0
  %267 = vmatprep.mubr.bf16.mxu0 0
  %268 = vmatmul.mubr.bf16.gmra.mrb[0].mxu0 %v107
  %v269 = vpop.f32.mrb[0].mxu0
  %v270 = vadd.f32 %v129, %v269
  %v271 = vpop.f32.mrb[0].mxu0
  %v272 = vpop.f32.mrb[0].mxu0
  %v273 = vadd.f32 %v129, %v272
  %v274 = vpop.f32.mrb[0].mxu0
  %275 = vdwg.mxu0
  %s276 = smul.u32 4, 16
  %s277 = smul.u32 %s276, 1
  %s278 = sshll.u32 %s277, 4
  %279 = dma.done [#allocation3], %s278
  %v280 = vld [vmem:[#allocation2] sm:$0xff]
  %v281 = vld [vmem:[#allocation2 + $0x8] sm:$0xff]
  %v282 = vld [vmem:[#allocation2 + $0x10] sm:$0xff]
  %v283 = vld [vmem:[#allocation2 + $0x18] sm:$0xff]
  %v284 = vld [vmem:[#allocation2 + $0x20] sm:$0xff]
  %v285 = vld [vmem:[#allocation2 + $0x28] sm:$0xff]
  %v286 = vld [vmem:[#allocation2 + $0x30] sm:$0xff]
  %v287 = vld [vmem:[#allocation2 + $0x38] sm:$0xff]
  %v288 = vpack.c.bf16 %v217, %v214
  %v289 = vpack.c.bf16 %v225, %v222
  %v290 = vpack.c.bf16 %v233, %v230
  %v291 = vpack.c.bf16 %v241, %v238
  %v292 = vpack.c.bf16 %v249, %v246
  %v293 = vpack.c.bf16 %v257, %v254
  %v294 = vpack.c.bf16 %v265, %v262
  %v295 = vpack.c.bf16 %v273, %v270
  %296 = vmatprep.subr.bf16.mxu0 0
  %297 = vmatpush1.bf16.msra.mxu0 %v288
  %298 = vmatprep.subr.bf16.mxu0 0
  %299 = vmatpush1.bf16.msra.mxu0 %v289
  %300 = vmatprep.subr.bf16.mxu0 0
  %301 = vmatpush1.bf16.msra.mxu0 %v290
  %302 = vmatprep.subr.bf16.mxu0 0
  %303 = vmatpush1.bf16.msra.mxu0 %v291
  %304 = vmatprep.subr.bf16.mxu0 0
  %305 = vmatpush1.bf16.msra.mxu0 %v292
  %306 = vmatprep.subr.bf16.mxu0 0
  %307 = vmatpush1.bf16.msra.mxu0 %v293
  %308 = vmatprep.subr.bf16.mxu0 0
  %309 = vmatpush1.bf16.msra.mxu0 %v294
  %310 = vmatprep.subr.bf16.mxu0 0
  %311 = vmatpush1.bf16.msra.mxu0 %v295
  %312 = vmatprep.subr.bf16.mxu0 0
  %313 = vmatpush1.bf16.msra.mxu0 0
  %314 = vmatprep.subr.bf16.mxu0 0
  %315 = vmatpush1.bf16.msra.mxu0 0
  %316 = vmatprep.subr.bf16.mxu0 0
  %317 = vmatpush1.bf16.msra.mxu0 0
  %318 = vmatprep.subr.bf16.mxu0 0
  %319 = vmatpush1.bf16.msra.mxu0 0
  %320 = vmatprep.subr.bf16.mxu0 0
  %321 = vmatpush1.bf16.msra.mxu0 0
  %322 = vmatprep.subr.bf16.mxu0 0
  %323 = vmatpush1.bf16.msra.mxu0 0
  %324 = vmatprep.subr.bf16.mxu0 0
  %325 = vmatpush1.bf16.msra.mxu0 0
  %326 = vmatprep.subr.bf16.mxu0 0
  %327 = vmatpush1.bf16.msra.mxu0 0
  %328 = vmatprep.mubr.bf16.mxu0 0
  %329 = vmatmul.mubr.bf16.gmra.mrb[0].mxu0 %v280
  %v330 = vpop.f32.mrb[0].mxu0
  %v331 = vadd.f32 0.0, %v330
  %v332 = vpop.f32.mrb[0].mxu0
  %v333 = vpop.f32.mrb[0].mxu0
  %v334 = vadd.f32 0.0, %v333
  %v335 = vpop.f32.mrb[0].mxu0
  %336 = vmatprep.mubr.bf16.mxu0 0
  %337 = vmatmul.mubr.bf16.gmra.mrb[0].mxu0 %v281
  %v338 = vpop.f32.mrb[0].mxu0
  %v339 = vadd.f32 0.0, %v338
  %v340 = vpop.f32.mrb[0].mxu0
  %v341 = vpop.f32.mrb[0].mxu0
  %v342 = vadd.f32 0.0, %v341
  %v343 = vpop.f32.mrb[0].mxu0
  %344 = vmatprep.mubr.bf16.mxu0 0
  %345 = vmatmul.mubr.bf16.gmra.mrb[0].mxu0 %v282
  %v346 = vpop.f32.mrb[0].mxu0
  %v347 = vadd.f32 0.0, %v346
  %v348 = vpop.f32.mrb[0].mxu0
  %v349 = vpop.f32.mrb[0].mxu0
  %v350 = vadd.f32 0.0, %v349
  %v351 = vpop.f32.mrb[0].mxu0
  %352 = vmatprep.mubr.bf16.mxu0 0
  %353 = vmatmul.mubr.bf16.gmra.mrb[0].mxu0 %v283
  %v354 = vpop.f32.mrb[0].mxu0
  %v355 = vadd.f32 0.0, %v354
  %v356 = vpop.f32.mrb[0].mxu0
  %v357 = vpop.f32.mrb[0].mxu0
  %v358 = vadd.f32 0.0, %v357
  %v359 = vpop.f32.mrb[0].mxu0
  %360 = vmatprep.mubr.bf16.mxu0 0
  %361 = vmatmul.mubr.bf16.gmra.mrb[0].mxu0 %v284
  %v362 = vpop.f32.mrb[0].mxu0
  %v363 = vadd.f32 0.0, %v362
  %v364 = vpop.f32.mrb[0].mxu0
  %v365 = vpop.f32.mrb[0].mxu0
  %v366 = vadd.f32 0.0, %v365
  %v367 = vpop.f32.mrb[0].mxu0
  %368 = vmatprep.mubr.bf16.mxu0 0
  %369 = vmatmul.mubr.bf16.gmra.mrb[0].mxu0 %v285
  %v370 = vpop.f32.mrb[0].mxu0
  %v371 = vadd.f32 0.0, %v370
  %v372 = vpop.f32.mrb[0].mxu0
  %v373 = vpop.f32.mrb[0].mxu0
  %v374 = vadd.f32 0.0, %v373
  %v375 = vpop.f32.mrb[0].mxu0
  %376 = vmatprep.mubr.bf16.mxu0 0
  %377 = vmatmul.mubr.bf16.gmra.mrb[0].mxu0 %v286
  %v378 = vpop.f32.mrb[0].mxu0
  %v379 = vadd.f32 0.0, %v378
  %v380 = vpop.f32.mrb[0].mxu0
  %v381 = vpop.f32.mrb[0].mxu0
  %v382 = vadd.f32 0.0, %v381
  %v383 = vpop.f32.mrb[0].mxu0
  %384 = vmatprep.mubr.bf16.mxu0 0
  %385 = vmatmul.mubr.bf16.gmra.mrb[0].mxu0 %v287
  %v386 = vpop.f32.mrb[0].mxu0
  %v387 = vadd.f32 0.0, %v386
  %v388 = vpop.f32.mrb[0].mxu0
  %v389 = vpop.f32.mrb[0].mxu0
  %v390 = vadd.f32 0.0, %v389
  %v391 = vpop.f32.mrb[0].mxu0
  %392 = vdwg.mxu0
  %v393 = vpack.c.bf16 %v334, %v331
  %v394 = vpack.c.bf16 %v342, %v339
  %v395 = vpack.c.bf16 %v350, %v347
  %v396 = vpack.c.bf16 %v358, %v355
  %v397 = vpack.c.bf16 %v366, %v363
  %v398 = vpack.c.bf16 %v374, %v371
  %v399 = vpack.c.bf16 %v382, %v379
  %v400 = vpack.c.bf16 %v390, %v387
  %v401 = vld [vmem:[%s5] sm:$0xf]
  %v402 = vld [vmem:[%s5 + $0x4] sm:$0xf]
  %v403 = vld [vmem:[%s5 + $0x8] sm:$0xf]
  %v404 = vld [vmem:[%s5 + $0xc] sm:$0xf]
  %v405 = vld [vmem:[%s5 + $0x10] sm:$0xf]
  %v406 = vld [vmem:[%s5 + $0x14] sm:$0xf]
  %v407 = vld [vmem:[%s5 + $0x18] sm:$0xf]
  %v408 = vld [vmem:[%s5 + $0x1c] sm:$0xf]
  %v409 = vld [vmem:[%s5 + $0x20] sm:$0xf]
  %v410 = vld [vmem:[%s5 + $0x24] sm:$0xf]
  %v411 = vld [vmem:[%s5 + $0x28] sm:$0xf]
  %v412 = vld [vmem:[%s5 + $0x2c] sm:$0xf]
  %v413 = vld [vmem:[%s5 + $0x30] sm:$0xf]
  %v414 = vld [vmem:[%s5 + $0x34] sm:$0xf]
  %v415 = vld [vmem:[%s5 + $0x38] sm:$0xf]
  %v416 = vld [vmem:[%s5 + $0x3c] sm:$0xf]
  %v417 = vld [vmem:[%s6] sm:$0x1]
  %v419 = vlaneseq
  %v420 = vshrl.u32 %v419, 7
  %v421 = vsub.s32 0, %v420
  %v422 = vrot.slane %v417, %v421
  %v440 = vunpack.c.l.b16 %v401
  %v441 = vunpack.c.l.b16 %v402
  %v442 = vunpack.c.l.b16 %v403
  %v443 = vunpack.c.l.b16 %v404
  %v444 = vunpack.c.l.b16 %v405
  %v445 = vunpack.c.l.b16 %v406
  %v446 = vunpack.c.l.b16 %v407
  %v447 = vunpack.c.l.b16 %v408
  %v448 = vunpack.c.l.b16 %v409
  %v449 = vunpack.c.l.b16 %v410
  %v450 = vunpack.c.l.b16 %v411
  %v451 = vunpack.c.l.b16 %v412
  %v452 = vunpack.c.l.b16 %v413
  %v453 = vunpack.c.l.b16 %v414
  %v454 = vunpack.c.l.b16 %v415
  %v455 = vunpack.c.l.b16 %v416
  %v456 = vpack.c.b16 %v441, %v440
  %v457 = vpack.c.b16 %v443, %v442
  %v458 = vpack.c.b16 %v445, %v444
  %v459 = vpack.c.b16 %v447, %v446
  %v460 = vpack.c.b16 %v449, %v448
  %v461 = vpack.c.b16 %v451, %v450
  %v462 = vpack.c.b16 %v453, %v452
  %v463 = vpack.c.b16 %v455, %v454
  %472 = vmatprep.subr.bf16.mxu0 0
  %473 = vmatpush1.bf16.msra.mxu0 %v456
  %474 = vmatprep.subr.bf16.mxu0 0
  %475 = vmatpush1.bf16.msra.mxu0 %v457
  %476 = vmatprep.subr.bf16.mxu0 0
  %477 = vmatpush1.bf16.msra.mxu0 %v458
  %478 = vmatprep.subr.bf16.mxu0 0
  %479 = vmatpush1.bf16.msra.mxu0 %v459
  %480 = vmatprep.subr.bf16.mxu0 0
  %481 = vmatpush1.bf16.msra.mxu0 %v460
  %482 = vmatprep.subr.bf16.mxu0 0
  %483 = vmatpush1.bf16.msra.mxu0 %v461
  %484 = vmatprep.subr.bf16.mxu0 0
  %485 = vmatpush1.bf16.msra.mxu0 %v462
  %486 = vmatprep.subr.bf16.mxu0 0
  %487 = vmatpush1.bf16.msra.mxu0 %v463
  %488 = vmatprep.subr.bf16.mxu0 0
  %489 = vmatpush1.bf16.msra.mxu0 0
  %490 = vmatprep.subr.bf16.mxu0 0
  %491 = vmatpush1.bf16.msra.mxu0 0
  %492 = vmatprep.subr.bf16.mxu0 0
  %493 = vmatpush1.bf16.msra.mxu0 0
  %494 = vmatprep.subr.bf16.mxu0 0
  %495 = vmatpush1.bf16.msra.mxu0 0
  %496 = vmatprep.subr.bf16.mxu0 0
  %497 = vmatpush1.bf16.msra.mxu0 0
  %498 = vmatprep.subr.bf16.mxu0 0
  %499 = vmatpush1.bf16.msra.mxu0 0
  %500 = vmatprep.subr.bf16.mxu0 0
  %501 = vmatpush1.bf16.msra.mxu0 0
  %502 = vmatprep.subr.bf16.mxu0 0
  %503 = vmatpush1.bf16.msra.mxu0 0
  %504 = vmatprep.mubr.bf16.mxu0 0
  %505 = vmatmul.mubr.bf16.gmra.mrb[0].mxu0 %v393
  %v506 = vpop.f32.mrb[0].mxu0
  %v507 = vadd.f32 %v422, %v506
  %v508 = vpop.f32.mrb[0].mxu0
  %v509 = vpop.f32.mrb[0].mxu0
  %v510 = vadd.f32 %v422, %v509
  %v511 = vpop.f32.mrb[0].mxu0
  %512 = vmatprep.mubr.bf16.mxu0 0
  %513 = vmatmul.mubr.bf16.gmra.mrb[0].mxu0 %v394
  %v514 = vpop.f32.mrb[0].mxu0
  %v515 = vadd.f32 %v422, %v514
  %v516 = vpop.f32.mrb[0].mxu0
  %v517 = vpop.f32.mrb[0].mxu0
  %v518 = vadd.f32 %v422, %v517
  %v519 = vpop.f32.mrb[0].mxu0
  %520 = vmatprep.mubr.bf16.mxu0 0
  %521 = vmatmul.mubr.bf16.gmra.mrb[0].mxu0 %v395
  %v522 = vpop.f32.mrb[0].mxu0
  %v523 = vadd.f32 %v422, %v522
  %v524 = vpop.f32.mrb[0].mxu0
  %v525 = vpop.f32.mrb[0].mxu0
  %v526 = vadd.f32 %v422, %v525
  %v527 = vpop.f32.mrb[0].mxu0
  %528 = vmatprep.mubr.bf16.mxu0 0
  %529 = vmatmul.mubr.bf16.gmra.mrb[0].mxu0 %v396
  %v530 = vpop.f32.mrb[0].mxu0
  %v531 = vadd.f32 %v422, %v530
  %v532 = vpop.f32.mrb[0].mxu0
  %v533 = vpop.f32.mrb[0].mxu0
  %v534 = vadd.f32 %v422, %v533
  %v535 = vpop.f32.mrb[0].mxu0
  %536 = vmatprep.mubr.bf16.mxu0 0
  %537 = vmatmul.mubr.bf16.gmra.mrb[0].mxu0 %v397
  %v538 = vpop.f32.mrb[0].mxu0
  %v539 = vadd.f32 %v422, %v538
  %v540 = vpop.f32.mrb[0].mxu0
  %v541 = vpop.f32.mrb[0].mxu0
  %v542 = vadd.f32 %v422, %v541
  %v543 = vpop.f32.mrb[0].mxu0
  %544 = vmatprep.mubr.bf16.mxu0 0
  %545 = vmatmul.mubr.bf16.gmra.mrb[0].mxu0 %v398
  %v546 = vpop.f32.mrb[0].mxu0
  %v547 = vadd.f32 %v422, %v546
  %v548 = vpop.f32.mrb[0].mxu0
  %v549 = vpop.f32.mrb[0].mxu0
  %v550 = vadd.f32 %v422, %v549
  %v551 = vpop.f32.mrb[0].mxu0
  %552 = vmatprep.mubr.bf16.mxu0 0
  %553 = vmatmul.mubr.bf16.gmra.mrb[0].mxu0 %v399
  %v554 = vpop.f32.mrb[0].mxu0
  %v555 = vadd.f32 %v422, %v554
  %v556 = vpop.f32.mrb[0].mxu0
  %v557 = vpop.f32.mrb[0].mxu0
  %v558 = vadd.f32 %v422, %v557
  %v559 = vpop.f32.mrb[0].mxu0
  %560 = vmatprep.mubr.bf16.mxu0 0
  %561 = vmatmul.mubr.bf16.gmra.mrb[0].mxu0 %v400
  %v562 = vpop.f32.mrb[0].mxu0
  %v563 = vadd.f32 %v422, %v562
  %v564 = vpop.f32.mrb[0].mxu0
  %v565 = vpop.f32.mrb[0].mxu0
  %v566 = vadd.f32 %v422, %v565
  %v567 = vpop.f32.mrb[0].mxu0
  %568 = vdwg.mxu0
  %v569 = vmax.f32 %v507, 0.0
  %v570 = vmax.f32 %v510, 0.0
  %v571 = vmax.f32 %v515, 0.0
  %v572 = vmax.f32 %v518, 0.0
  %v573 = vmax.f32 %v523, 0.0
  %v574 = vmax.f32 %v526, 0.0
  %v575 = vmax.f32 %v531, 0.0
  %v576 = vmax.f32 %v534, 0.0
  %v577 = vmax.f32 %v539, 0.0
  %v578 = vmax.f32 %v542, 0.0
  %v579 = vmax.f32 %v547, 0.0
  %v580 = vmax.f32 %v550, 0.0
  %v581 = vmax.f32 %v555, 0.0
  %v582 = vmax.f32 %v558, 0.0
  %v583 = vmax.f32 %v563, 0.0
  %v584 = vmax.f32 %v566, 0.0
  %v585 = vpack.c.bf16 %v570, %v569
  %v586 = vpack.c.bf16 %v572, %v571
  %v587 = vpack.c.bf16 %v574, %v573
  %v588 = vpack.c.bf16 %v576, %v575
  %v589 = vpack.c.bf16 %v578, %v577
  %v590 = vpack.c.bf16 %v580, %v579
  %v591 = vpack.c.bf16 %v582, %v581
  %v592 = vpack.c.bf16 %v584, %v583
  %593 = vmatprep.subr.bf16.mxu0 0
  %594 = vmatpush1.bf16.msra.mxu0 %v585
  %595 = vmatprep.subr.bf16.mxu0 0
  %596 = vmatpush1.bf16.msra.mxu0 %v586
  %597 = vmatprep.subr.bf16.mxu0 0
  %598 = vmatpush1.bf16.msra.mxu0 %v587
  %599 = vmatprep.subr.bf16.mxu0 0
  %600 = vmatpush1.bf16.msra.mxu0 %v588
  %601 = vmatprep.subr.bf16.mxu0 0
  %602 = vmatpush1.bf16.msra.mxu0 %v589
  %603 = vmatprep.subr.bf16.mxu0 0
  %604 = vmatpush1.bf16.msra.mxu0 %v590
  %605 = vmatprep.subr.bf16.mxu0 0
  %606 = vmatpush1.bf16.msra.mxu0 %v591
  %607 = vmatprep.subr.bf16.mxu0 0
  %608 = vmatpush1.bf16.msra.mxu0 %v592
  %609 = vmatprep.subr.bf16.mxu0 0
  %610 = vmatpush1.bf16.msra.mxu0 0
  %611 = vmatprep.subr.bf16.mxu0 0
  %612 = vmatpush1.bf16.msra.mxu0 0
  %613 = vmatprep.subr.bf16.mxu0 0
  %614 = vmatpush1.bf16.msra.mxu0 0
  %615 = vmatprep.subr.bf16.mxu0 0
  %616 = vmatpush1.bf16.msra.mxu0 0
  %617 = vmatprep.subr.bf16.mxu0 0
  %618 = vmatpush1.bf16.msra.mxu0 0
  %619 = vmatprep.subr.bf16.mxu0 0
  %620 = vmatpush1.bf16.msra.mxu0 0
  %621 = vmatprep.subr.bf16.mxu0 0
  %622 = vmatpush1.bf16.msra.mxu0 0
  %623 = vmatprep.subr.bf16.mxu0 0
  %624 = vmatpush1.bf16.msra.mxu0 0
  %625 = vmatprep.mubr.bf16.mxu0 0
  %626 = vmatmul.mubr.bf16.gmra.mrb[0].mxu0 %v280
  %v627 = vpop.f32.mrb[0].mxu0
  %v628 = vadd.f32 0.0, %v627
  %v629 = vpop.f32.mrb[0].mxu0
  %v630 = vpop.f32.mrb[0].mxu0
  %v631 = vadd.f32 0.0, %v630
  %v632 = vpop.f32.mrb[0].mxu0
  %633 = vmatprep.mubr.bf16.mxu0 0
  %634 = vmatmul.mubr.bf16.gmra.mrb[0].mxu0 %v281
  %v635 = vpop.f32.mrb[0].mxu0
  %v636 = vadd.f32 0.0, %v635
  %v637 = vpop.f32.mrb[0].mxu0
  %v638 = vpop.f32.mrb[0].mxu0
  %v639 = vadd.f32 0.0, %v638
  %v640 = vpop.f32.mrb[0].mxu0
  %641 = vmatprep.mubr.bf16.mxu0 0
  %642 = vmatmul.mubr.bf16.gmra.mrb[0].mxu0 %v282
  %v643 = vpop.f32.mrb[0].mxu0
  %v644 = vadd.f32 0.0, %v643
  %v645 = vpop.f32.mrb[0].mxu0
  %v646 = vpop.f32.mrb[0].mxu0
  %v647 = vadd.f32 0.0, %v646
  %v648 = vpop.f32.mrb[0].mxu0
  %649 = vmatprep.mubr.bf16.mxu0 0
  %650 = vmatmul.mubr.bf16.gmra.mrb[0].mxu0 %v283
  %v651 = vpop.f32.mrb[0].mxu0
  %v652 = vadd.f32 0.0, %v651
  %v653 = vpop.f32.mrb[0].mxu0
  %v654 = vpop.f32.mrb[0].mxu0
  %v655 = vadd.f32 0.0, %v654
  %v656 = vpop.f32.mrb[0].mxu0
  %657 = vmatprep.mubr.bf16.mxu0 0
  %658 = vmatmul.mubr.bf16.gmra.mrb[0].mxu0 %v284
  %v659 = vpop.f32.mrb[0].mxu0
  %v660 = vadd.f32 0.0, %v659
  %v661 = vpop.f32.mrb[0].mxu0
  %v662 = vpop.f32.mrb[0].mxu0
  %v663 = vadd.f32 0.0, %v662
  %v664 = vpop.f32.mrb[0].mxu0
  %665 = vmatprep.mubr.bf16.mxu0 0
  %666 = vmatmul.mubr.bf16.gmra.mrb[0].mxu0 %v285
  %v667 = vpop.f32.mrb[0].mxu0
  %v668 = vadd.f32 0.0, %v667
  %v669 = vpop.f32.mrb[0].mxu0
  %v670 = vpop.f32.mrb[0].mxu0
  %v671 = vadd.f32 0.0, %v670
  %v672 = vpop.f32.mrb[0].mxu0
  %673 = vmatprep.mubr.bf16.mxu0 0
  %674 = vmatmul.mubr.bf16.gmra.mrb[0].mxu0 %v286
  %v675 = vpop.f32.mrb[0].mxu0
  %v676 = vadd.f32 0.0, %v675
  %v677 = vpop.f32.mrb[0].mxu0
  %v678 = vpop.f32.mrb[0].mxu0
  %v679 = vadd.f32 0.0, %v678
  %v680 = vpop.f32.mrb[0].mxu0
  %681 = vmatprep.mubr.bf16.mxu0 0
  %682 = vmatmul.mubr.bf16.gmra.mrb[0].mxu0 %v287
  %v683 = vpop.f32.mrb[0].mxu0
  %v684 = vadd.f32 0.0, %v683
  %v685 = vpop.f32.mrb[0].mxu0
  %v686 = vpop.f32.mrb[0].mxu0
  %v687 = vadd.f32 0.0, %v686
  %v688 = vpop.f32.mrb[0].mxu0
  %689 = vdwg.mxu0
  %v690 = vpack.c.bf16 %v631, %v628
  %v691 = vpack.c.bf16 %v639, %v636
  %v692 = vpack.c.bf16 %v647, %v644
  %v693 = vpack.c.bf16 %v655, %v652
  %v694 = vpack.c.bf16 %v663, %v660
  %v695 = vpack.c.bf16 %v671, %v668
  %v696 = vpack.c.bf16 %v679, %v676
  %v697 = vpack.c.bf16 %v687, %v684
  %s698 = scalar_lea.vmem %s5, 64
  %v699 = vld [vmem:[%s698] sm:$0xf]
  %v700 = vld [vmem:[%s698 + $0x4] sm:$0xf]
  %v701 = vld [vmem:[%s698 + $0x8] sm:$0xf]
  %v702 = vld [vmem:[%s698 + $0xc] sm:$0xf]
  %v703 = vld [vmem:[%s698 + $0x10] sm:$0xf]
  %v704 = vld [vmem:[%s698 + $0x14] sm:$0xf]
  %v705 = vld [vmem:[%s698 + $0x18] sm:$0xf]
  %v706 = vld [vmem:[%s698 + $0x1c] sm:$0xf]
  %v707 = vld [vmem:[%s698 + $0x20] sm:$0xf]
  %v708 = vld [vmem:[%s698 + $0x24] sm:$0xf]
  %v709 = vld [vmem:[%s698 + $0x28] sm:$0xf]
  %v710 = vld [vmem:[%s698 + $0x2c] sm:$0xf]
  %v711 = vld [vmem:[%s698 + $0x30] sm:$0xf]
  %v712 = vld [vmem:[%s698 + $0x34] sm:$0xf]
  %v713 = vld [vmem:[%s698 + $0x38] sm:$0xf]
  %v714 = vld [vmem:[%s698 + $0x3c] sm:$0xf]
  %s715 = scalar_lea.vmem %s6, 1
  %v716 = vld [vmem:[%s715] sm:$0x1]
  %v718 = vlaneseq
  %v719 = vshrl.u32 %v718, 7
  %v720 = vsub.s32 0, %v719
  %v721 = vrot.slane %v716, %v720
  %v739 = vunpack.c.l.b16 %v699
  %v740 = vunpack.c.l.b16 %v700
  %v741 = vunpack.c.l.b16 %v701
  %v742 = vunpack.c.l.b16 %v702
  %v743 = vunpack.c.l.b16 %v703
  %v744 = vunpack.c.l.b16 %v704
  %v745 = vunpack.c.l.b16 %v705
  %v746 = vunpack.c.l.b16 %v706
  %v747 = vunpack.c.l.b16 %v707
  %v748 = vunpack.c.l.b16 %v708
  %v749 = vunpack.c.l.b16 %v709
  %v750 = vunpack.c.l.b16 %v710
  %v751 = vunpack.c.l.b16 %v711
  %v752 = vunpack.c.l.b16 %v712
  %v753 = vunpack.c.l.b16 %v713
  %v754 = vunpack.c.l.b16 %v714
  %v755 = vpack.c.b16 %v740, %v739
  %v756 = vpack.c.b16 %v742, %v741
  %v757 = vpack.c.b16 %v744, %v743
  %v758 = vpack.c.b16 %v746, %v745
  %v759 = vpack.c.b16 %v748, %v747
  %v760 = vpack.c.b16 %v750, %v749
  %v761 = vpack.c.b16 %v752, %v751
  %v762 = vpack.c.b16 %v754, %v753
  %771 = vmatprep.subr.bf16.mxu0 0
  %772 = vmatpush1.bf16.msra.mxu0 %v755
  %773 = vmatprep.subr.bf16.mxu0 0
  %774 = vmatpush1.bf16.msra.mxu0 %v756
  %775 = vmatprep.subr.bf16.mxu0 0
  %776 = vmatpush1.bf16.msra.mxu0 %v757
  %777 = vmatprep.subr.bf16.mxu0 0
  %778 = vmatpush1.bf16.msra.mxu0 %v758
  %779 = vmatprep.subr.bf16.mxu0 0
  %780 = vmatpush1.bf16.msra.mxu0 %v759
  %781 = vmatprep.subr.bf16.mxu0 0
  %782 = vmatpush1.bf16.msra.mxu0 %v760
  %783 = vmatprep.subr.bf16.mxu0 0
  %784 = vmatpush1.bf16.msra.mxu0 %v761
  %785 = vmatprep.subr.bf16.mxu0 0
  %786 = vmatpush1.bf16.msra.mxu0 %v762
  %787 = vmatprep.subr.bf16.mxu0 0
  %788 = vmatpush1.bf16.msra.mxu0 0
  %789 = vmatprep.subr.bf16.mxu0 0
  %790 = vmatpush1.bf16.msra.mxu0 0
  %791 = vmatprep.subr.bf16.mxu0 0
  %792 = vmatpush1.bf16.msra.mxu0 0
  %793 = vmatprep.subr.bf16.mxu0 0
  %794 = vmatpush1.bf16.msra.mxu0 0
  %795 = vmatprep.subr.bf16.mxu0 0
  %796 = vmatpush1.bf16.msra.mxu0 0
  %797 = vmatprep.subr.bf16.mxu0 0
  %798 = vmatpush1.bf16.msra.mxu0 0
  %799 = vmatprep.subr.bf16.mxu0 0
  %800 = vmatpush1.bf16.msra.mxu0 0
  %801 = vmatprep.subr.bf16.mxu0 0
  %802 = vmatpush1.bf16.msra.mxu0 0
  %803 = vmatprep.mubr.bf16.mxu0 0
  %804 = vmatmul.mubr.bf16.gmra.mrb[0].mxu0 %v690
  %v805 = vpop.f32.mrb[0].mxu0
  %v806 = vadd.f32 %v721, %v805
  %v807 = vpop.f32.mrb[0].mxu0
  %v808 = vpop.f32.mrb[0].mxu0
  %v809 = vadd.f32 %v721, %v808
  %v810 = vpop.f32.mrb[0].mxu0
  %811 = vmatprep.mubr.bf16.mxu0 0
  %812 = vmatmul.mubr.bf16.gmra.mrb[0].mxu0 %v691
  %v813 = vpop.f32.mrb[0].mxu0
  %v814 = vadd.f32 %v721, %v813
  %v815 = vpop.f32.mrb[0].mxu0
  %v816 = vpop.f32.mrb[0].mxu0
  %v817 = vadd.f32 %v721, %v816
  %v818 = vpop.f32.mrb[0].mxu0
  %819 = vmatprep.mubr.bf16.mxu0 0
  %820 = vmatmul.mubr.bf16.gmra.mrb[0].mxu0 %v692
  %v821 = vpop.f32.mrb[0].mxu0
  %v822 = vadd.f32 %v721, %v821
  %v823 = vpop.f32.mrb[0].mxu0
  %v824 = vpop.f32.mrb[0].mxu0
  %v825 = vadd.f32 %v721, %v824
  %v826 = vpop.f32.mrb[0].mxu0
  %827 = vmatprep.mubr.bf16.mxu0 0
  %828 = vmatmul.mubr.bf16.gmra.mrb[0].mxu0 %v693
  %v829 = vpop.f32.mrb[0].mxu0
  %v830 = vadd.f32 %v721, %v829
  %v831 = vpop.f32.mrb[0].mxu0
  %v832 = vpop.f32.mrb[0].mxu0
  %v833 = vadd.f32 %v721, %v832
  %v834 = vpop.f32.mrb[0].mxu0
  %835 = vmatprep.mubr.bf16.mxu0 0
  %836 = vmatmul.mubr.bf16.gmra.mrb[0].mxu0 %v694
  %v837 = vpop.f32.mrb[0].mxu0
  %v838 = vadd.f32 %v721, %v837
  %v839 = vpop.f32.mrb[0].mxu0
  %v840 = vpop.f32.mrb[0].mxu0
  %v841 = vadd.f32 %v721, %v840
  %v842 = vpop.f32.mrb[0].mxu0
  %843 = vmatprep.mubr.bf16.mxu0 0
  %844 = vmatmul.mubr.bf16.gmra.mrb[0].mxu0 %v695
  %v845 = vpop.f32.mrb[0].mxu0
  %v846 = vadd.f32 %v721, %v845
  %v847 = vpop.f32.mrb[0].mxu0
  %v848 = vpop.f32.mrb[0].mxu0
  %v849 = vadd.f32 %v721, %v848
  %v850 = vpop.f32.mrb[0].mxu0
  %851 = vmatprep.mubr.bf16.mxu0 0
  %852 = vmatmul.mubr.bf16.gmra.mrb[0].mxu0 %v696
  %v853 = vpop.f32.mrb[0].mxu0
  %v854 = vadd.f32 %v721, %v853
  %v855 = vpop.f32.mrb[0].mxu0
  %v856 = vpop.f32.mrb[0].mxu0
  %v857 = vadd.f32 %v721, %v856
  %v858 = vpop.f32.mrb[0].mxu0
  %859 = vmatprep.mubr.bf16.mxu0 0
  %860 = vmatmul.mubr.bf16.gmra.mrb[0].mxu0 %v697
  %v861 = vpop.f32.mrb[0].mxu0
  %v862 = vadd.f32 %v721, %v861
  %v863 = vpop.f32.mrb[0].mxu0
  %v864 = vpop.f32.mrb[0].mxu0
  %v865 = vadd.f32 %v721, %v864
  %v866 = vpop.f32.mrb[0].mxu0
  %867 = vdwg.mxu0
  %v868 = vmax.f32 %v806, 0.0
  %v869 = vmax.f32 %v809, 0.0
  %v870 = vmax.f32 %v814, 0.0
  %v871 = vmax.f32 %v817, 0.0
  %v872 = vmax.f32 %v822, 0.0
  %v873 = vmax.f32 %v825, 0.0
  %v874 = vmax.f32 %v830, 0.0
  %v875 = vmax.f32 %v833, 0.0
  %v876 = vmax.f32 %v838, 0.0
  %v877 = vmax.f32 %v841, 0.0
  %v878 = vmax.f32 %v846, 0.0
  %v879 = vmax.f32 %v849, 0.0
  %v880 = vmax.f32 %v854, 0.0
  %v881 = vmax.f32 %v857, 0.0
  %v882 = vmax.f32 %v862, 0.0
  %v883 = vmax.f32 %v865, 0.0
  %v884 = vpack.c.bf16 %v869, %v868
  %v885 = vpack.c.bf16 %v871, %v870
  %v886 = vpack.c.bf16 %v873, %v872
  %v887 = vpack.c.bf16 %v875, %v874
  %v888 = vpack.c.bf16 %v877, %v876
  %v889 = vpack.c.bf16 %v879, %v878
  %v890 = vpack.c.bf16 %v881, %v880
  %v891 = vpack.c.bf16 %v883, %v882
  %892 = vmatprep.subr.bf16.mxu0 0
  %893 = vmatpush1.bf16.msra.mxu0 %v884
  %894 = vmatprep.subr.bf16.mxu0 0
  %895 = vmatpush1.bf16.msra.mxu0 %v885
  %896 = vmatprep.subr.bf16.mxu0 0
  %897 = vmatpush1.bf16.msra.mxu0 %v886
  %898 = vmatprep.subr.bf16.mxu0 0
  %899 = vmatpush1.bf16.msra.mxu0 %v887
  %900 = vmatprep.subr.bf16.mxu0 0
  %901 = vmatpush1.bf16.msra.mxu0 %v888
  %902 = vmatprep.subr.bf16.mxu0 0
  %903 = vmatpush1.bf16.msra.mxu0 %v889
  %904 = vmatprep.subr.bf16.mxu0 0
  %905 = vmatpush1.bf16.msra.mxu0 %v890
  %906 = vmatprep.subr.bf16.mxu0 0
  %907 = vmatpush1.bf16.msra.mxu0 %v891
  %908 = vmatprep.subr.bf16.mxu0 0
  %909 = vmatpush1.bf16.msra.mxu0 0
  %910 = vmatprep.subr.bf16.mxu0 0
  %911 = vmatpush1.bf16.msra.mxu0 0
  %912 = vmatprep.subr.bf16.mxu0 0
  %913 = vmatpush1.bf16.msra.mxu0 0
  %914 = vmatprep.subr.bf16.mxu0 0
  %915 = vmatpush1.bf16.msra.mxu0 0
  %916 = vmatprep.subr.bf16.mxu0 0
  %917 = vmatpush1.bf16.msra.mxu0 0
  %918 = vmatprep.subr.bf16.mxu0 0
  %919 = vmatpush1.bf16.msra.mxu0 0
  %920 = vmatprep.subr.bf16.mxu0 0
  %921 = vmatpush1.bf16.msra.mxu0 0
  %922 = vmatprep.subr.bf16.mxu0 0
  %923 = vmatpush1.bf16.msra.mxu0 0
  %924 = vmatprep.mubr.bf16.mxu0 0
  %925 = vmatmul.mubr.bf16.gmra.mrb[0].mxu0 %v280
  %v926 = vpop.f32.mrb[0].mxu0
  %v927 = vadd.f32 0.0, %v926
  %v928 = vpop.f32.mrb[0].mxu0
  %v929 = vpop.f32.mrb[0].mxu0
  %v930 = vadd.f32 0.0, %v929
  %v931 = vpop.f32.mrb[0].mxu0
  %932 = vmatprep.mubr.bf16.mxu0 0
  %933 = vmatmul.mubr.bf16.gmra.mrb[0].mxu0 %v281
  %v934 = vpop.f32.mrb[0].mxu0
  %v935 = vadd.f32 0.0, %v934
  %v936 = vpop.f32.mrb[0].mxu0
  %v937 = vpop.f32.mrb[0].mxu0
  %v938 = vadd.f32 0.0, %v937
  %v939 = vpop.f32.mrb[0].mxu0
  %940 = vmatprep.mubr.bf16.mxu0 0
  %941 = vmatmul.mubr.bf16.gmra.mrb[0].mxu0 %v282
  %v942 = vpop.f32.mrb[0].mxu0
  %v943 = vadd.f32 0.0, %v942
  %v944 = vpop.f32.mrb[0].mxu0
  %v945 = vpop.f32.mrb[0].mxu0
  %v946 = vadd.f32 0.0, %v945
  %v947 = vpop.f32.mrb[0].mxu0
  %948 = vmatprep.mubr.bf16.mxu0 0
  %949 = vmatmul.mubr.bf16.gmra.mrb[0].mxu0 %v283
  %v950 = vpop.f32.mrb[0].mxu0
  %v951 = vadd.f32 0.0, %v950
  %v952 = vpop.f32.mrb[0].mxu0
  %v953 = vpop.f32.mrb[0].mxu0
  %v954 = vadd.f32 0.0, %v953
  %v955 = vpop.f32.mrb[0].mxu0
  %956 = vmatprep.mubr.bf16.mxu0 0
  %957 = vmatmul.mubr.bf16.gmra.mrb[0].mxu0 %v284
  %v958 = vpop.f32.mrb[0].mxu0
  %v959 = vadd.f32 0.0, %v958
  %v960 = vpop.f32.mrb[0].mxu0
  %v961 = vpop.f32.mrb[0].mxu0
  %v962 = vadd.f32 0.0, %v961
  %v963 = vpop.f32.mrb[0].mxu0
  %964 = vmatprep.mubr.bf16.mxu0 0
  %965 = vmatmul.mubr.bf16.gmra.mrb[0].mxu0 %v285
  %v966 = vpop.f32.mrb[0].mxu0
  %v967 = vadd.f32 0.0, %v966
  %v968 = vpop.f32.mrb[0].mxu0
  %v969 = vpop.f32.mrb[0].mxu0
  %v970 = vadd.f32 0.0, %v969
  %v971 = vpop.f32.mrb[0].mxu0
  %972 = vmatprep.mubr.bf16.mxu0 0
  %973 = vmatmul.mubr.bf16.gmra.mrb[0].mxu0 %v286
  %v974 = vpop.f32.mrb[0].mxu0
  %v975 = vadd.f32 0.0, %v974
  %v976 = vpop.f32.mrb[0].mxu0
  %v977 = vpop.f32.mrb[0].mxu0
  %v978 = vadd.f32 0.0, %v977
  %v979 = vpop.f32.mrb[0].mxu0
  %980 = vmatprep.mubr.bf16.mxu0 0
  %981 = vmatmul.mubr.bf16.gmra.mrb[0].mxu0 %v287
  %v982 = vpop.f32.mrb[0].mxu0
  %v983 = vadd.f32 0.0, %v982
  %v984 = vpop.f32.mrb[0].mxu0
  %v985 = vpop.f32.mrb[0].mxu0
  %v986 = vadd.f32 0.0, %v985
  %v987 = vpop.f32.mrb[0].mxu0
  %988 = vdwg.mxu0
  %v989 = vpack.c.bf16 %v930, %v927
  %v990 = vpack.c.bf16 %v938, %v935
  %v991 = vpack.c.bf16 %v946, %v943
  %v992 = vpack.c.bf16 %v954, %v951
  %v993 = vpack.c.bf16 %v962, %v959
  %v994 = vpack.c.bf16 %v970, %v967
  %v995 = vpack.c.bf16 %v978, %v975
  %v996 = vpack.c.bf16 %v986, %v983
  %s997 = scalar_lea.vmem %s5, 128
  %v998 = vld [vmem:[%s997] sm:$0xf]
  %v999 = vld [vmem:[%s997 + $0x4] sm:$0xf]
  %v1000 = vld [vmem:[%s997 + $0x8] sm:$0xf]
  %v1001 = vld [vmem:[%s997 + $0xc] sm:$0xf]
  %v1002 = vld [vmem:[%s997 + $0x10] sm:$0xf]
  %v1003 = vld [vmem:[%s997 + $0x14] sm:$0xf]
  %v1004 = vld [vmem:[%s997 + $0x18] sm:$0xf]
  %v1005 = vld [vmem:[%s997 + $0x1c] sm:$0xf]
  %v1006 = vld [vmem:[%s997 + $0x20] sm:$0xf]
  %v1007 = vld [vmem:[%s997 + $0x24] sm:$0xf]
  %v1008 = vld [vmem:[%s997 + $0x28] sm:$0xf]
  %v1009 = vld [vmem:[%s997 + $0x2c] sm:$0xf]
  %v1010 = vld [vmem:[%s997 + $0x30] sm:$0xf]
  %v1011 = vld [vmem:[%s997 + $0x34] sm:$0xf]
  %v1012 = vld [vmem:[%s997 + $0x38] sm:$0xf]
  %v1013 = vld [vmem:[%s997 + $0x3c] sm:$0xf]
  %s1014 = scalar_lea.vmem %s6, 2
  %v1015 = vld [vmem:[%s1014] sm:$0x1]
  %v1017 = vlaneseq
  %v1018 = vshrl.u32 %v1017, 7
  %v1019 = vsub.s32 0, %v1018
  %v1020 = vrot.slane %v1015, %v1019
  %v1038 = vunpack.c.l.b16 %v998
  %v1039 = vunpack.c.l.b16 %v999
  %v1040 = vunpack.c.l.b16 %v1000
  %v1041 = vunpack.c.l.b16 %v1001
  %v1042 = vunpack.c.l.b16 %v1002
  %v1043 = vunpack.c.l.b16 %v1003
  %v1044 = vunpack.c.l.b16 %v1004
  %v1045 = vunpack.c.l.b16 %v1005
  %v1046 = vunpack.c.l.b16 %v1006
  %v1047 = vunpack.c.l.b16 %v1007
  %v1048 = vunpack.c.l.b16 %v1008
  %v1049 = vunpack.c.l.b16 %v1009
  %v1050 = vunpack.c.l.b16 %v1010
  %v1051 = vunpack.c.l.b16 %v1011
  %v1052 = vunpack.c.l.b16 %v1012
  %v1053 = vunpack.c.l.b16 %v1013
  %v1054 = vpack.c.b16 %v1039, %v1038
  %v1055 = vpack.c.b16 %v1041, %v1040
  %v1056 = vpack.c.b16 %v1043, %v1042
  %v1057 = vpack.c.b16 %v1045, %v1044
  %v1058 = vpack.c.b16 %v1047, %v1046
  %v1059 = vpack.c.b16 %v1049, %v1048
  %v1060 = vpack.c.b16 %v1051, %v1050
  %v1061 = vpack.c.b16 %v1053, %v1052
  %1070 = vmatprep.subr.bf16.mxu0 0
  %1071 = vmatpush1.bf16.msra.mxu0 %v1054
  %1072 = vmatprep.subr.bf16.mxu0 0
  %1073 = vmatpush1.bf16.msra.mxu0 %v1055
  %1074 = vmatprep.subr.bf16.mxu0 0
  %1075 = vmatpush1.bf16.msra.mxu0 %v1056
  %1076 = vmatprep.subr.bf16.mxu0 0
  %1077 = vmatpush1.bf16.msra.mxu0 %v1057
  %1078 = vmatprep.subr.bf16.mxu0 0
  %1079 = vmatpush1.bf16.msra.mxu0 %v1058
  %1080 = vmatprep.subr.bf16.mxu0 0
  %1081 = vmatpush1.bf16.msra.mxu0 %v1059
  %1082 = vmatprep.subr.bf16.mxu0 0
  %1083 = vmatpush1.bf16.msra.mxu0 %v1060
  %1084 = vmatprep.subr.bf16.mxu0 0
  %1085 = vmatpush1.bf16.msra.mxu0 %v1061
  %1086 = vmatprep.subr.bf16.mxu0 0
  %1087 = vmatpush1.bf16.msra.mxu0 0
  %1088 = vmatprep.subr.bf16.mxu0 0
  %1089 = vmatpush1.bf16.msra.mxu0 0
  %1090 = vmatprep.subr.bf16.mxu0 0
  %1091 = vmatpush1.bf16.msra.mxu0 0
  %1092 = vmatprep.subr.bf16.mxu0 0
  %1093 = vmatpush1.bf16.msra.mxu0 0
  %1094 = vmatprep.subr.bf16.mxu0 0
  %1095 = vmatpush1.bf16.msra.mxu0 0
  %1096 = vmatprep.subr.bf16.mxu0 0
  %1097 = vmatpush1.bf16.msra.mxu0 0
  %1098 = vmatprep.subr.bf16.mxu0 0
  %1099 = vmatpush1.bf16.msra.mxu0 0
  %1100 = vmatprep.subr.bf16.mxu0 0
  %1101 = vmatpush1.bf16.msra.mxu0 0
  %1102 = vmatprep.mubr.bf16.mxu0 0
  %1103 = vmatmul.mubr.bf16.gmra.mrb[0].mxu0 %v989
  %v1104 = vpop.f32.mrb[0].mxu0
  %v1105 = vadd.f32 %v1020, %v1104
  %v1106 = vpop.f32.mrb[0].mxu0
  %v1107 = vpop.f32.mrb[0].mxu0
  %v1108 = vadd.f32 %v1020, %v1107
  %v1109 = vpop.f32.mrb[0].mxu0
  %1110 = vmatprep.mubr.bf16.mxu0 0
  %1111 = vmatmul.mubr.bf16.gmra.mrb[0].mxu0 %v990
  %v1112 = vpop.f32.mrb[0].mxu0
  %v1113 = vadd.f32 %v1020, %v1112
  %v1114 = vpop.f32.mrb[0].mxu0
  %v1115 = vpop.f32.mrb[0].mxu0
  %v1116 = vadd.f32 %v1020, %v1115
  %v1117 = vpop.f32.mrb[0].mxu0
  %1118 = vmatprep.mubr.bf16.mxu0 0
  %1119 = vmatmul.mubr.bf16.gmra.mrb[0].mxu0 %v991
  %v1120 = vpop.f32.mrb[0].mxu0
  %v1121 = vadd.f32 %v1020, %v1120
  %v1122 = vpop.f32.mrb[0].mxu0
  %v1123 = vpop.f32.mrb[0].mxu0
  %v1124 = vadd.f32 %v1020, %v1123
  %v1125 = vpop.f32.mrb[0].mxu0
  %1126 = vmatprep.mubr.bf16.mxu0 0
  %1127 = vmatmul.mubr.bf16.gmra.mrb[0].mxu0 %v992
  %v1128 = vpop.f32.mrb[0].mxu0
  %v1129 = vadd.f32 %v1020, %v1128
  %v1130 = vpop.f32.mrb[0].mxu0
  %v1131 = vpop.f32.mrb[0].mxu0
  %v1132 = vadd.f32 %v1020, %v1131
  %v1133 = vpop.f32.mrb[0].mxu0
  %1134 = vmatprep.mubr.bf16.mxu0 0
  %1135 = vmatmul.mubr.bf16.gmra.mrb[0].mxu0 %v993
  %v1136 = vpop.f32.mrb[0].mxu0
  %v1137 = vadd.f32 %v1020, %v1136
  %v1138 = vpop.f32.mrb[0].mxu0
  %v1139 = vpop.f32.mrb[0].mxu0
  %v1140 = vadd.f32 %v1020, %v1139
  %v1141 = vpop.f32.mrb[0].mxu0
  %1142 = vmatprep.mubr.bf16.mxu0 0
  %1143 = vmatmul.mubr.bf16.gmra.mrb[0].mxu0 %v994
  %v1144 = vpop.f32.mrb[0].mxu0
  %v1145 = vadd.f32 %v1020, %v1144
  %v1146 = vpop.f32.mrb[0].mxu0
  %v1147 = vpop.f32.mrb[0].mxu0
  %v1148 = vadd.f32 %v1020, %v1147
  %v1149 = vpop.f32.mrb[0].mxu0
  %1150 = vmatprep.mubr.bf16.mxu0 0
  %1151 = vmatmul.mubr.bf16.gmra.mrb[0].mxu0 %v995
  %v1152 = vpop.f32.mrb[0].mxu0
  %v1153 = vadd.f32 %v1020, %v1152
  %v1154 = vpop.f32.mrb[0].mxu0
  %v1155 = vpop.f32.mrb[0].mxu0
  %v1156 = vadd.f32 %v1020, %v1155
  %v1157 = vpop.f32.mrb[0].mxu0
  %1158 = vmatprep.mubr.bf16.mxu0 0
  %1159 = vmatmul.mubr.bf16.gmra.mrb[0].mxu0 %v996
  %v1160 = vpop.f32.mrb[0].mxu0
  %v1161 = vadd.f32 %v1020, %v1160
  %v1162 = vpop.f32.mrb[0].mxu0
  %v1163 = vpop.f32.mrb[0].mxu0
  %v1164 = vadd.f32 %v1020, %v1163
  %v1165 = vpop.f32.mrb[0].mxu0
  %1166 = vdwg.mxu0
  %v1167 = vmax.f32 %v1105, 0.0
  %v1168 = vmax.f32 %v1108, 0.0
  %v1169 = vmax.f32 %v1113, 0.0
  %v1170 = vmax.f32 %v1116, 0.0
  %v1171 = vmax.f32 %v1121, 0.0
  %v1172 = vmax.f32 %v1124, 0.0
  %v1173 = vmax.f32 %v1129, 0.0
  %v1174 = vmax.f32 %v1132, 0.0
  %v1175 = vmax.f32 %v1137, 0.0
  %v1176 = vmax.f32 %v1140, 0.0
  %v1177 = vmax.f32 %v1145, 0.0
  %v1178 = vmax.f32 %v1148, 0.0
  %v1179 = vmax.f32 %v1153, 0.0
  %v1180 = vmax.f32 %v1156, 0.0
  %v1181 = vmax.f32 %v1161, 0.0
  %v1182 = vmax.f32 %v1164, 0.0
  %v1183 = vpack.c.bf16 %v1168, %v1167
  %v1184 = vpack.c.bf16 %v1170, %v1169
  %v1185 = vpack.c.bf16 %v1172, %v1171
  %v1186 = vpack.c.bf16 %v1174, %v1173
  %v1187 = vpack.c.bf16 %v1176, %v1175
  %v1188 = vpack.c.bf16 %v1178, %v1177
  %v1189 = vpack.c.bf16 %v1180, %v1179
  %v1190 = vpack.c.bf16 %v1182, %v1181
  %1191 = vmatprep.subr.bf16.mxu0 0
  %1192 = vmatpush1.bf16.msra.mxu0 %v1183
  %1193 = vmatprep.subr.bf16.mxu0 0
  %1194 = vmatpush1.bf16.msra.mxu0 %v1184
  %1195 = vmatprep.subr.bf16.mxu0 0
  %1196 = vmatpush1.bf16.msra.mxu0 %v1185
  %1197 = vmatprep.subr.bf16.mxu0 0
  %1198 = vmatpush1.bf16.msra.mxu0 %v1186
  %1199 = vmatprep.subr.bf16.mxu0 0
  %1200 = vmatpush1.bf16.msra.mxu0 %v1187
  %1201 = vmatprep.subr.bf16.mxu0 0
  %1202 = vmatpush1.bf16.msra.mxu0 %v1188
  %1203 = vmatprep.subr.bf16.mxu0 0
  %1204 = vmatpush1.bf16.msra.mxu0 %v1189
  %1205 = vmatprep.subr.bf16.mxu0 0
  %1206 = vmatpush1.bf16.msra.mxu0 %v1190
  %1207 = vmatprep.subr.bf16.mxu0 0
  %1208 = vmatpush1.bf16.msra.mxu0 0
  %1209 = vmatprep.subr.bf16.mxu0 0
  %1210 = vmatpush1.bf16.msra.mxu0 0
  %1211 = vmatprep.subr.bf16.mxu0 0
  %1212 = vmatpush1.bf16.msra.mxu0 0
  %1213 = vmatprep.subr.bf16.mxu0 0
  %1214 = vmatpush1.bf16.msra.mxu0 0
  %1215 = vmatprep.subr.bf16.mxu0 0
  %1216 = vmatpush1.bf16.msra.mxu0 0
  %1217 = vmatprep.subr.bf16.mxu0 0
  %1218 = vmatpush1.bf16.msra.mxu0 0
  %1219 = vmatprep.subr.bf16.mxu0 0
  %1220 = vmatpush1.bf16.msra.mxu0 0
  %1221 = vmatprep.subr.bf16.mxu0 0
  %1222 = vmatpush1.bf16.msra.mxu0 0
  %1223 = vmatprep.mubr.bf16.mxu0 0
  %1224 = vmatmul.mubr.bf16.gmra.mrb[0].mxu0 %v280
  %v1225 = vpop.f32.mrb[0].mxu0
  %v1226 = vadd.f32 0.0, %v1225
  %v1227 = vpop.f32.mrb[0].mxu0
  %v1228 = vpop.f32.mrb[0].mxu0
  %v1229 = vadd.f32 0.0, %v1228
  %v1230 = vpop.f32.mrb[0].mxu0
  %1231 = vmatprep.mubr.bf16.mxu0 0
  %1232 = vmatmul.mubr.bf16.gmra.mrb[0].mxu0 %v281
  %v1233 = vpop.f32.mrb[0].mxu0
  %v1234 = vadd.f32 0.0, %v1233
  %v1235 = vpop.f32.mrb[0].mxu0
  %v1236 = vpop.f32.mrb[0].mxu0
  %v1237 = vadd.f32 0.0, %v1236
  %v1238 = vpop.f32.mrb[0].mxu0
  %1239 = vmatprep.mubr.bf16.mxu0 0
  %1240 = vmatmul.mubr.bf16.gmra.mrb[0].mxu0 %v282
  %v1241 = vpop.f32.mrb[0].mxu0
  %v1242 = vadd.f32 0.0, %v1241
  %v1243 = vpop.f32.mrb[0].mxu0
  %v1244 = vpop.f32.mrb[0].mxu0
  %v1245 = vadd.f32 0.0, %v1244
  %v1246 = vpop.f32.mrb[0].mxu0
  %1247 = vmatprep.mubr.bf16.mxu0 0
  %1248 = vmatmul.mubr.bf16.gmra.mrb[0].mxu0 %v283
  %v1249 = vpop.f32.mrb[0].mxu0
  %v1250 = vadd.f32 0.0, %v1249
  %v1251 = vpop.f32.mrb[0].mxu0
  %v1252 = vpop.f32.mrb[0].mxu0
  %v1253 = vadd.f32 0.0, %v1252
  %v1254 = vpop.f32.mrb[0].mxu0
  %1255 = vmatprep.mubr.bf16.mxu0 0
  %1256 = vmatmul.mubr.bf16.gmra.mrb[0].mxu0 %v284
  %v1257 = vpop.f32.mrb[0].mxu0
  %v1258 = vadd.f32 0.0, %v1257
  %v1259 = vpop.f32.mrb[0].mxu0
  %v1260 = vpop.f32.mrb[0].mxu0
  %v1261 = vadd.f32 0.0, %v1260
  %v1262 = vpop.f32.mrb[0].mxu0
  %1263 = vmatprep.mubr.bf16.mxu0 0
  %1264 = vmatmul.mubr.bf16.gmra.mrb[0].mxu0 %v285
  %v1265 = vpop.f32.mrb[0].mxu0
  %v1266 = vadd.f32 0.0, %v1265
  %v1267 = vpop.f32.mrb[0].mxu0
  %v1268 = vpop.f32.mrb[0].mxu0
  %v1269 = vadd.f32 0.0, %v1268
  %v1270 = vpop.f32.mrb[0].mxu0
  %1271 = vmatprep.mubr.bf16.mxu0 0
  %1272 = vmatmul.mubr.bf16.gmra.mrb[0].mxu0 %v286
  %v1273 = vpop.f32.mrb[0].mxu0
  %v1274 = vadd.f32 0.0, %v1273
  %v1275 = vpop.f32.mrb[0].mxu0
  %v1276 = vpop.f32.mrb[0].mxu0
  %v1277 = vadd.f32 0.0, %v1276
  %v1278 = vpop.f32.mrb[0].mxu0
  %1279 = vmatprep.mubr.bf16.mxu0 0
  %1280 = vmatmul.mubr.bf16.gmra.mrb[0].mxu0 %v287
  %v1281 = vpop.f32.mrb[0].mxu0
  %v1282 = vadd.f32 0.0, %v1281
  %v1283 = vpop.f32.mrb[0].mxu0
  %v1284 = vpop.f32.mrb[0].mxu0
  %v1285 = vadd.f32 0.0, %v1284
  %v1286 = vpop.f32.mrb[0].mxu0
  %1287 = vdwg.mxu0
  %v1288 = vpack.c.bf16 %v1229, %v1226
  %v1289 = vpack.c.bf16 %v1237, %v1234
  %v1290 = vpack.c.bf16 %v1245, %v1242
  %v1291 = vpack.c.bf16 %v1253, %v1250
  %v1292 = vpack.c.bf16 %v1261, %v1258
  %v1293 = vpack.c.bf16 %v1269, %v1266
  %v1294 = vpack.c.bf16 %v1277, %v1274
  %v1295 = vpack.c.bf16 %v1285, %v1282
  %s1296 = scalar_lea.vmem %s5, 192
  %v1297 = vld [vmem:[%s1296] sm:$0xf]
  %v1298 = vld [vmem:[%s1296 + $0x4] sm:$0xf]
  %v1299 = vld [vmem:[%s1296 + $0x8] sm:$0xf]
  %v1300 = vld [vmem:[%s1296 + $0xc] sm:$0xf]
  %v1301 = vld [vmem:[%s1296 + $0x10] sm:$0xf]
  %v1302 = vld [vmem:[%s1296 + $0x14] sm:$0xf]
  %v1303 = vld [vmem:[%s1296 + $0x18] sm:$0xf]
  %v1304 = vld [vmem:[%s1296 + $0x1c] sm:$0xf]
  %v1305 = vld [vmem:[%s1296 + $0x20] sm:$0xf]
  %v1306 = vld [vmem:[%s1296 + $0x24] sm:$0xf]
  %v1307 = vld [vmem:[%s1296 + $0x28] sm:$0xf]
  %v1308 = vld [vmem:[%s1296 + $0x2c] sm:$0xf]
  %v1309 = vld [vmem:[%s1296 + $0x30] sm:$0xf]
  %v1310 = vld [vmem:[%s1296 + $0x34] sm:$0xf]
  %v1311 = vld [vmem:[%s1296 + $0x38] sm:$0xf]
  %v1312 = vld [vmem:[%s1296 + $0x3c] sm:$0xf]
  %s1313 = scalar_lea.vmem %s6, 3
  %v1314 = vld [vmem:[%s1313] sm:$0x1]
  %v1316 = vlaneseq
  %v1317 = vshrl.u32 %v1316, 7
  %v1318 = vsub.s32 0, %v1317
  %v1319 = vrot.slane %v1314, %v1318
  %v1337 = vunpack.c.l.b16 %v1297
  %v1338 = vunpack.c.l.b16 %v1298
  %v1339 = vunpack.c.l.b16 %v1299
  %v1340 = vunpack.c.l.b16 %v1300
  %v1341 = vunpack.c.l.b16 %v1301
  %v1342 = vunpack.c.l.b16 %v1302
  %v1343 = vunpack.c.l.b16 %v1303
  %v1344 = vunpack.c.l.b16 %v1304
  %v1345 = vunpack.c.l.b16 %v1305
  %v1346 = vunpack.c.l.b16 %v1306
  %v1347 = vunpack.c.l.b16 %v1307
  %v1348 = vunpack.c.l.b16 %v1308
  %v1349 = vunpack.c.l.b16 %v1309
  %v1350 = vunpack.c.l.b16 %v1310
  %v1351 = vunpack.c.l.b16 %v1311
  %v1352 = vunpack.c.l.b16 %v1312
  %v1353 = vpack.c.b16 %v1338, %v1337
  %v1354 = vpack.c.b16 %v1340, %v1339
  %v1355 = vpack.c.b16 %v1342, %v1341
  %v1356 = vpack.c.b16 %v1344, %v1343
  %v1357 = vpack.c.b16 %v1346, %v1345
  %v1358 = vpack.c.b16 %v1348, %v1347
  %v1359 = vpack.c.b16 %v1350, %v1349
  %v1360 = vpack.c.b16 %v1352, %v1351
  %1369 = vmatprep.subr.bf16.mxu0 0
  %1370 = vmatpush1.bf16.msra.mxu0 %v1353
  %1371 = vmatprep.subr.bf16.mxu0 0
  %1372 = vmatpush1.bf16.msra.mxu0 %v1354
  %1373 = vmatprep.subr.bf16.mxu0 0
  %1374 = vmatpush1.bf16.msra.mxu0 %v1355
  %1375 = vmatprep.subr.bf16.mxu0 0
  %1376 = vmatpush1.bf16.msra.mxu0 %v1356
  %1377 = vmatprep.subr.bf16.mxu0 0
  %1378 = vmatpush1.bf16.msra.mxu0 %v1357
  %1379 = vmatprep.subr.bf16.mxu0 0
  %1380 = vmatpush1.bf16.msra.mxu0 %v1358
  %1381 = vmatprep.subr.bf16.mxu0 0
  %1382 = vmatpush1.bf16.msra.mxu0 %v1359
  %1383 = vmatprep.subr.bf16.mxu0 0
  %1384 = vmatpush1.bf16.msra.mxu0 %v1360
  %1385 = vmatprep.subr.bf16.mxu0 0
  %1386 = vmatpush1.bf16.msra.mxu0 0
  %1387 = vmatprep.subr.bf16.mxu0 0
  %1388 = vmatpush1.bf16.msra.mxu0 0
  %1389 = vmatprep.subr.bf16.mxu0 0
  %1390 = vmatpush1.bf16.msra.mxu0 0
  %1391 = vmatprep.subr.bf16.mxu0 0
  %1392 = vmatpush1.bf16.msra.mxu0 0
  %1393 = vmatprep.subr.bf16.mxu0 0
  %1394 = vmatpush1.bf16.msra.mxu0 0
  %1395 = vmatprep.subr.bf16.mxu0 0
  %1396 = vmatpush1.bf16.msra.mxu0 0
  %1397 = vmatprep.subr.bf16.mxu0 0
  %1398 = vmatpush1.bf16.msra.mxu0 0
  %1399 = vmatprep.subr.bf16.mxu0 0
  %1400 = vmatpush1.bf16.msra.mxu0 0
  %1401 = vmatprep.mubr.bf16.mxu0 0
  %1402 = vmatmul.mubr.bf16.gmra.mrb[0].mxu0 %v1288
  %v1403 = vpop.f32.mrb[0].mxu0
  %v1404 = vadd.f32 %v1319, %v1403
  %v1405 = vpop.f32.mrb[0].mxu0
  %v1406 = vpop.f32.mrb[0].mxu0
  %v1407 = vadd.f32 %v1319, %v1406
  %v1408 = vpop.f32.mrb[0].mxu0
  %1409 = vmatprep.mubr.bf16.mxu0 0
  %1410 = vmatmul.mubr.bf16.gmra.mrb[0].mxu0 %v1289
  %v1411 = vpop.f32.mrb[0].mxu0
  %v1412 = vadd.f32 %v1319, %v1411
  %v1413 = vpop.f32.mrb[0].mxu0
  %v1414 = vpop.f32.mrb[0].mxu0
  %v1415 = vadd.f32 %v1319, %v1414
  %v1416 = vpop.f32.mrb[0].mxu0
  %1417 = vmatprep.mubr.bf16.mxu0 0
  %1418 = vmatmul.mubr.bf16.gmra.mrb[0].mxu0 %v1290
  %v1419 = vpop.f32.mrb[0].mxu0
  %v1420 = vadd.f32 %v1319, %v1419
  %v1421 = vpop.f32.mrb[0].mxu0
  %v1422 = vpop.f32.mrb[0].mxu0
  %v1423 = vadd.f32 %v1319, %v1422
  %v1424 = vpop.f32.mrb[0].mxu0
  %1425 = vmatprep.mubr.bf16.mxu0 0
  %1426 = vmatmul.mubr.bf16.gmra.mrb[0].mxu0 %v1291
  %v1427 = vpop.f32.mrb[0].mxu0
  %v1428 = vadd.f32 %v1319, %v1427
  %v1429 = vpop.f32.mrb[0].mxu0
  %v1430 = vpop.f32.mrb[0].mxu0
  %v1431 = vadd.f32 %v1319, %v1430
  %v1432 = vpop.f32.mrb[0].mxu0
  %1433 = vmatprep.mubr.bf16.mxu0 0
  %1434 = vmatmul.mubr.bf16.gmra.mrb[0].mxu0 %v1292
  %v1435 = vpop.f32.mrb[0].mxu0
  %v1436 = vadd.f32 %v1319, %v1435
  %v1437 = vpop.f32.mrb[0].mxu0
  %v1438 = vpop.f32.mrb[0].mxu0
  %v1439 = vadd.f32 %v1319, %v1438
  %v1440 = vpop.f32.mrb[0].mxu0
  %1441 = vmatprep.mubr.bf16.mxu0 0
  %1442 = vmatmul.mubr.bf16.gmra.mrb[0].mxu0 %v1293
  %v1443 = vpop.f32.mrb[0].mxu0
  %v1444 = vadd.f32 %v1319, %v1443
  %v1445 = vpop.f32.mrb[0].mxu0
  %v1446 = vpop.f32.mrb[0].mxu0
  %v1447 = vadd.f32 %v1319, %v1446
  %v1448 = vpop.f32.mrb[0].mxu0
  %1449 = vmatprep.mubr.bf16.mxu0 0
  %1450 = vmatmul.mubr.bf16.gmra.mrb[0].mxu0 %v1294
  %v1451 = vpop.f32.mrb[0].mxu0
  %v1452 = vadd.f32 %v1319, %v1451
  %v1453 = vpop.f32.mrb[0].mxu0
  %v1454 = vpop.f32.mrb[0].mxu0
  %v1455 = vadd.f32 %v1319, %v1454
  %v1456 = vpop.f32.mrb[0].mxu0
  %1457 = vmatprep.mubr.bf16.mxu0 0
  %1458 = vmatmul.mubr.bf16.gmra.mrb[0].mxu0 %v1295
  %v1459 = vpop.f32.mrb[0].mxu0
  %v1460 = vadd.f32 %v1319, %v1459
  %v1461 = vpop.f32.mrb[0].mxu0
  %v1462 = vpop.f32.mrb[0].mxu0
  %v1463 = vadd.f32 %v1319, %v1462
  %v1464 = vpop.f32.mrb[0].mxu0
  %1465 = vdwg.mxu0
  %v1466 = vmax.f32 %v1404, 0.0
  %v1467 = vmax.f32 %v1407, 0.0
  %v1468 = vmax.f32 %v1412, 0.0
  %v1469 = vmax.f32 %v1415, 0.0
  %v1470 = vmax.f32 %v1420, 0.0
  %v1471 = vmax.f32 %v1423, 0.0
  %v1472 = vmax.f32 %v1428, 0.0
  %v1473 = vmax.f32 %v1431, 0.0
  %v1474 = vmax.f32 %v1436, 0.0
  %v1475 = vmax.f32 %v1439, 0.0
  %v1476 = vmax.f32 %v1444, 0.0
  %v1477 = vmax.f32 %v1447, 0.0
  %v1478 = vmax.f32 %v1452, 0.0
  %v1479 = vmax.f32 %v1455, 0.0
  %v1480 = vmax.f32 %v1460, 0.0
  %v1481 = vmax.f32 %v1463, 0.0
  %v1482 = vld [vmem:[%s2] sm:$0xff]
  %v1483 = vld [vmem:[%s2 + $0x8] sm:$0xff]
  %v1484 = vld [vmem:[%s2 + $0x10] sm:$0xff]
  %v1485 = vld [vmem:[%s2 + $0x18] sm:$0xff]
  %v1486 = vld [vmem:[%s2 + $0x20] sm:$0xff]
  %v1487 = vld [vmem:[%s2 + $0x28] sm:$0xff]
  %v1488 = vld [vmem:[%s2 + $0x30] sm:$0xff]
  %v1489 = vld [vmem:[%s2 + $0x38] sm:$0xff]
  %v1490 = vld [vmem:[%s2 + $0x40] sm:$0xff]
  %v1491 = vld [vmem:[%s2 + $0x48] sm:$0xff]
  %v1492 = vld [vmem:[%s2 + $0x50] sm:$0xff]
  %v1493 = vld [vmem:[%s2 + $0x58] sm:$0xff]
  %v1494 = vld [vmem:[%s2 + $0x60] sm:$0xff]
  %v1495 = vld [vmem:[%s2 + $0x68] sm:$0xff]
  %v1496 = vld [vmem:[%s2 + $0x70] sm:$0xff]
  %v1497 = vld [vmem:[%s2 + $0x78] sm:$0xff]
  %1499 = vset.pattern.permute.xlu0 0
  %1500 = vperm.xlu0 %1499, %v1482
  %v1501 = vpop.permute.xlu0 %1500
  %1504 = vset.pattern.permute.xlu0 0
  %1505 = vperm.xlu0 %1504, %v1483
  %v1506 = vpop.permute.xlu0 %1505
  %1509 = vset.pattern.permute.xlu0 0
  %1510 = vperm.xlu0 %1509, %v1484
  %v1511 = vpop.permute.xlu0 %1510
  %1514 = vset.pattern.permute.xlu0 0
  %1515 = vperm.xlu0 %1514, %v1485
  %v1516 = vpop.permute.xlu0 %1515
  %1519 = vset.pattern.permute.xlu0 0
  %1520 = vperm.xlu0 %1519, %v1486
  %v1521 = vpop.permute.xlu0 %1520
  %1524 = vset.pattern.permute.xlu0 0
  %1525 = vperm.xlu0 %1524, %v1487
  %v1526 = vpop.permute.xlu0 %1525
  %1529 = vset.pattern.permute.xlu0 0
  %1530 = vperm.xlu0 %1529, %v1488
  %v1531 = vpop.permute.xlu0 %1530
  %1534 = vset.pattern.permute.xlu0 0
  %1535 = vperm.xlu0 %1534, %v1489
  %v1536 = vpop.permute.xlu0 %1535
  %1539 = vset.pattern.permute.xlu0 0
  %1540 = vperm.xlu0 %1539, %v1490
  %v1541 = vpop.permute.xlu0 %1540
  %1544 = vset.pattern.permute.xlu0 0
  %1545 = vperm.xlu0 %1544, %v1491
  %v1546 = vpop.permute.xlu0 %1545
  %1549 = vset.pattern.permute.xlu0 0
  %1550 = vperm.xlu0 %1549, %v1492
  %v1551 = vpop.permute.xlu0 %1550
  %1554 = vset.pattern.permute.xlu0 0
  %1555 = vperm.xlu0 %1554, %v1493
  %v1556 = vpop.permute.xlu0 %1555
  %1559 = vset.pattern.permute.xlu0 0
  %1560 = vperm.xlu0 %1559, %v1494
  %v1561 = vpop.permute.xlu0 %1560
  %1564 = vset.pattern.permute.xlu0 0
  %1565 = vperm.xlu0 %1564, %v1495
  %v1566 = vpop.permute.xlu0 %1565
  %1569 = vset.pattern.permute.xlu0 0
  %1570 = vperm.xlu0 %1569, %v1496
  %v1571 = vpop.permute.xlu0 %1570
  %1574 = vset.pattern.permute.xlu0 0
  %1575 = vperm.xlu0 %1574, %v1497
  %v1576 = vpop.permute.xlu0 %1575
  %v1578 = vmul.f32 %v1466, %v1501
  %v1579 = vmul.f32 %v1467, %v1506
  %v1580 = vmul.f32 %v1468, %v1511
  %v1581 = vmul.f32 %v1469, %v1516
  %v1582 = vmul.f32 %v1470, %v1521
  %v1583 = vmul.f32 %v1471, %v1526
  %v1584 = vmul.f32 %v1472, %v1531
  %v1585 = vmul.f32 %v1473, %v1536
  %v1586 = vmul.f32 %v1474, %v1541
  %v1587 = vmul.f32 %v1475, %v1546
  %v1588 = vmul.f32 %v1476, %v1551
  %v1589 = vmul.f32 %v1477, %v1556
  %v1590 = vmul.f32 %v1478, %v1561
  %v1591 = vmul.f32 %v1479, %v1566
  %v1592 = vmul.f32 %v1480, %v1571
  %v1593 = vmul.f32 %v1481, %v1576
  %v1594 = vmax.f32 %v1578, %v1582
  %v1595 = vmax.f32 %v1579, %v1583
  %v1596 = vmax.f32 %v1580, %v1584
  %v1597 = vmax.f32 %v1581, %v1585
  %v1598 = vmax.f32 %v1594, %v1586
  %v1599 = vmax.f32 %v1595, %v1587
  %v1600 = vmax.f32 %v1596, %v1588
  %v1601 = vmax.f32 %v1597, %v1589
  %v1602 = vmax.f32 %v1598, %v1590
  %v1603 = vmax.f32 %v1599, %v1591
  %v1604 = vmax.f32 %v1600, %v1592
  %v1605 = vmax.f32 %v1601, %v1593
  %v1606 = vmax.f32 %v1602, %v1603
  %v1607 = vmax.f32 %v1604, %v1605
  %v1608 = vmax.f32 %v1606, %v1607
  %v1609 = vrot.slane %v1608, 4
  %v1610 = vmax.f32 %v1608, %v1609
  %v1611 = vrot.slane %v1610, 2
  %v1612 = vmax.f32 %v1610, %v1611
  %v1613 = vrot.slane %v1612, 1
  %v1614 = vmax.f32 %v1612, %v1613
  %1615 = vset.pattern.permute.xlu0 1
  %1616 = vperm.xlu0 %1615, %v1482
  %v1617 = vpop.permute.xlu0 %1616
  %1619 = vset.pattern.permute.xlu0 1
  %1620 = vperm.xlu0 %1619, %v1483
  %v1621 = vpop.permute.xlu0 %1620
  %1623 = vset.pattern.permute.xlu0 1
  %1624 = vperm.xlu0 %1623, %v1484
  %v1625 = vpop.permute.xlu0 %1624
  %1627 = vset.pattern.permute.xlu0 1
  %1628 = vperm.xlu0 %1627, %v1485
  %v1629 = vpop.permute.xlu0 %1628
  %1631 = vset.pattern.permute.xlu0 1
  %1632 = vperm.xlu0 %1631, %v1486
  %v1633 = vpop.permute.xlu0 %1632
  %1635 = vset.pattern.permute.xlu0 1
  %1636 = vperm.xlu0 %1635, %v1487
  %v1637 = vpop.permute.xlu0 %1636
  %1639 = vset.pattern.permute.xlu0 1
  %1640 = vperm.xlu0 %1639, %v1488
  %v1641 = vpop.permute.xlu0 %1640
  %1643 = vset.pattern.permute.xlu0 1
  %1644 = vperm.xlu0 %1643, %v1489
  %v1645 = vpop.permute.xlu0 %1644
  %1647 = vset.pattern.permute.xlu0 1
  %1648 = vperm.xlu0 %1647, %v1490
  %v1649 = vpop.permute.xlu0 %1648
  %1651 = vset.pattern.permute.xlu0 1
  %1652 = vperm.xlu0 %1651, %v1491
  %v1653 = vpop.permute.xlu0 %1652
  %1655 = vset.pattern.permute.xlu0 1
  %1656 = vperm.xlu0 %1655, %v1492
  %v1657 = vpop.permute.xlu0 %1656
  %1659 = vset.pattern.permute.xlu0 1
  %1660 = vperm.xlu0 %1659, %v1493
  %v1661 = vpop.permute.xlu0 %1660
  %1663 = vset.pattern.permute.xlu0 1
  %1664 = vperm.xlu0 %1663, %v1494
  %v1665 = vpop.permute.xlu0 %1664
  %1667 = vset.pattern.permute.xlu0 1
  %1668 = vperm.xlu0 %1667, %v1495
  %v1669 = vpop.permute.xlu0 %1668
  %1671 = vset.pattern.permute.xlu0 1
  %1672 = vperm.xlu0 %1671, %v1496
  %v1673 = vpop.permute.xlu0 %1672
  %1675 = vset.pattern.permute.xlu0 1
  %1676 = vperm.xlu0 %1675, %v1497
  %v1677 = vpop.permute.xlu0 %1676
  %v1679 = vmul.f32 %v1466, %v1617
  %v1680 = vmul.f32 %v1467, %v1621
  %v1681 = vmul.f32 %v1468, %v1625
  %v1682 = vmul.f32 %v1469, %v1629
  %v1683 = vmul.f32 %v1470, %v1633
  %v1684 = vmul.f32 %v1471, %v1637
  %v1685 = vmul.f32 %v1472, %v1641
  %v1686 = vmul.f32 %v1473, %v1645
  %v1687 = vmul.f32 %v1474, %v1649
  %v1688 = vmul.f32 %v1475, %v1653
  %v1689 = vmul.f32 %v1476, %v1657
  %v1690 = vmul.f32 %v1477, %v1661
  %v1691 = vmul.f32 %v1478, %v1665
  %v1692 = vmul.f32 %v1479, %v1669
  %v1693 = vmul.f32 %v1480, %v1673
  %v1694 = vmul.f32 %v1481, %v1677
  %v1695 = vmax.f32 %v1679, %v1683
  %v1696 = vmax.f32 %v1680, %v1684
  %v1697 = vmax.f32 %v1681, %v1685
  %v1698 = vmax.f32 %v1682, %v1686
  %v1699 = vmax.f32 %v1695, %v1687
  %v1700 = vmax.f32 %v1696, %v1688
  %v1701 = vmax.f32 %v1697, %v1689
  %v1702 = vmax.f32 %v1698, %v1690
  %v1703 = vmax.f32 %v1699, %v1691
  %v1704 = vmax.f32 %v1700, %v1692
  %v1705 = vmax.f32 %v1701, %v1693
  %v1706 = vmax.f32 %v1702, %v1694
  %v1707 = vmax.f32 %v1703, %v1704
  %v1708 = vmax.f32 %v1705, %v1706
  %v1709 = vmax.f32 %v1707, %v1708
  %v1710 = vrot.slane %v1709, 4
  %v1711 = vmax.f32 %v1709, %v1710
  %v1712 = vrot.slane %v1711, 2
  %v1713 = vmax.f32 %v1711, %v1712
  %v1714 = vrot.slane %v1713, 1
  %v1715 = vmax.f32 %v1713, %v1714
  %1716 = vset.pattern.permute.xlu0 2
  %1717 = vperm.xlu0 %1716, %v1482
  %v1718 = vpop.permute.xlu0 %1717
  %1720 = vset.pattern.permute.xlu0 2
  %1721 = vperm.xlu0 %1720, %v1483
  %v1722 = vpop.permute.xlu0 %1721
  %1724 = vset.pattern.permute.xlu0 2
  %1725 = vperm.xlu0 %1724, %v1484
  %v1726 = vpop.permute.xlu0 %1725
  %1728 = vset.pattern.permute.xlu0 2
  %1729 = vperm.xlu0 %1728, %v1485
  %v1730 = vpop.permute.xlu0 %1729
  %1732 = vset.pattern.permute.xlu0 2
  %1733 = vperm.xlu0 %1732, %v1486
  %v1734 = vpop.permute.xlu0 %1733
  %1736 = vset.pattern.permute.xlu0 2
  %1737 = vperm.xlu0 %1736, %v1487
  %v1738 = vpop.permute.xlu0 %1737
  %1740 = vset.pattern.permute.xlu0 2
  %1741 = vperm.xlu0 %1740, %v1488
  %v1742 = vpop.permute.xlu0 %1741
  %1744 = vset.pattern.permute.xlu0 2
  %1745 = vperm.xlu0 %1744, %v1489
  %v1746 = vpop.permute.xlu0 %1745
  %1748 = vset.pattern.permute.xlu0 2
  %1749 = vperm.xlu0 %1748, %v1490
  %v1750 = vpop.permute.xlu0 %1749
  %1752 = vset.pattern.permute.xlu0 2
  %1753 = vperm.xlu0 %1752, %v1491
  %v1754 = vpop.permute.xlu0 %1753
  %1756 = vset.pattern.permute.xlu0 2
  %1757 = vperm.xlu0 %1756, %v1492
  %v1758 = vpop.permute.xlu0 %1757
  %1760 = vset.pattern.permute.xlu0 2
  %1761 = vperm.xlu0 %1760, %v1493
  %v1762 = vpop.permute.xlu0 %1761
  %1764 = vset.pattern.permute.xlu0 2
  %1765 = vperm.xlu0 %1764, %v1494
  %v1766 = vpop.permute.xlu0 %1765
  %1768 = vset.pattern.permute.xlu0 2
  %1769 = vperm.xlu0 %1768, %v1495
  %v1770 = vpop.permute.xlu0 %1769
  %1772 = vset.pattern.permute.xlu0 2
  %1773 = vperm.xlu0 %1772, %v1496
  %v1774 = vpop.permute.xlu0 %1773
  %1776 = vset.pattern.permute.xlu0 2
  %1777 = vperm.xlu0 %1776, %v1497
  %v1778 = vpop.permute.xlu0 %1777
  %v1780 = vmul.f32 %v1466, %v1718
  %v1781 = vmul.f32 %v1467, %v1722
  %v1782 = vmul.f32 %v1468, %v1726
  %v1783 = vmul.f32 %v1469, %v1730
  %v1784 = vmul.f32 %v1470, %v1734
  %v1785 = vmul.f32 %v1471, %v1738
  %v1786 = vmul.f32 %v1472, %v1742
  %v1787 = vmul.f32 %v1473, %v1746
  %v1788 = vmul.f32 %v1474, %v1750
  %v1789 = vmul.f32 %v1475, %v1754
  %v1790 = vmul.f32 %v1476, %v1758
  %v1791 = vmul.f32 %v1477, %v1762
  %v1792 = vmul.f32 %v1478, %v1766
  %v1793 = vmul.f32 %v1479, %v1770
  %v1794 = vmul.f32 %v1480, %v1774
  %v1795 = vmul.f32 %v1481, %v1778
  %v1796 = vmax.f32 %v1780, %v1784
  %v1797 = vmax.f32 %v1781, %v1785
  %v1798 = vmax.f32 %v1782, %v1786
  %v1799 = vmax.f32 %v1783, %v1787
  %v1800 = vmax.f32 %v1796, %v1788
  %v1801 = vmax.f32 %v1797, %v1789
  %v1802 = vmax.f32 %v1798, %v1790
  %v1803 = vmax.f32 %v1799, %v1791
  %v1804 = vmax.f32 %v1800, %v1792
  %v1805 = vmax.f32 %v1801, %v1793
  %v1806 = vmax.f32 %v1802, %v1794
  %v1807 = vmax.f32 %v1803, %v1795
  %v1808 = vmax.f32 %v1804, %v1805
  %v1809 = vmax.f32 %v1806, %v1807
  %v1810 = vmax.f32 %v1808, %v1809
  %v1811 = vrot.slane %v1810, 4
  %v1812 = vmax.f32 %v1810, %v1811
  %v1813 = vrot.slane %v1812, 2
  %v1814 = vmax.f32 %v1812, %v1813
  %v1815 = vrot.slane %v1814, 1
  %v1816 = vmax.f32 %v1814, %v1815
  %1817 = vset.pattern.permute.xlu0 3
  %1818 = vperm.xlu0 %1817, %v1482
  %v1819 = vpop.permute.xlu0 %1818
  %1821 = vset.pattern.permute.xlu0 3
  %1822 = vperm.xlu0 %1821, %v1483
  %v1823 = vpop.permute.xlu0 %1822
  %1825 = vset.pattern.permute.xlu0 3
  %1826 = vperm.xlu0 %1825, %v1484
  %v1827 = vpop.permute.xlu0 %1826
  %1829 = vset.pattern.permute.xlu0 3
  %1830 = vperm.xlu0 %1829, %v1485
  %v1831 = vpop.permute.xlu0 %1830
  %1833 = vset.pattern.permute.xlu0 3
  %1834 = vperm.xlu0 %1833, %v1486
  %v1835 = vpop.permute.xlu0 %1834
  %1837 = vset.pattern.permute.xlu0 3
  %1838 = vperm.xlu0 %1837, %v1487
  %v1839 = vpop.permute.xlu0 %1838
  %1841 = vset.pattern.permute.xlu0 3
  %1842 = vperm.xlu0 %1841, %v1488
  %v1843 = vpop.permute.xlu0 %1842
  %1845 = vset.pattern.permute.xlu0 3
  %1846 = vperm.xlu0 %1845, %v1489
  %v1847 = vpop.permute.xlu0 %1846
  %1849 = vset.pattern.permute.xlu0 3
  %1850 = vperm.xlu0 %1849, %v1490
  %v1851 = vpop.permute.xlu0 %1850
  %1853 = vset.pattern.permute.xlu0 3
  %1854 = vperm.xlu0 %1853, %v1491
  %v1855 = vpop.permute.xlu0 %1854
  %1857 = vset.pattern.permute.xlu0 3
  %1858 = vperm.xlu0 %1857, %v1492
  %v1859 = vpop.permute.xlu0 %1858
  %1861 = vset.pattern.permute.xlu0 3
  %1862 = vperm.xlu0 %1861, %v1493
  %v1863 = vpop.permute.xlu0 %1862
  %1865 = vset.pattern.permute.xlu0 3
  %1866 = vperm.xlu0 %1865, %v1494
  %v1867 = vpop.permute.xlu0 %1866
  %1869 = vset.pattern.permute.xlu0 3
  %1870 = vperm.xlu0 %1869, %v1495
  %v1871 = vpop.permute.xlu0 %1870
  %1873 = vset.pattern.permute.xlu0 3
  %1874 = vperm.xlu0 %1873, %v1496
  %v1875 = vpop.permute.xlu0 %1874
  %1877 = vset.pattern.permute.xlu0 3
  %1878 = vperm.xlu0 %1877, %v1497
  %v1879 = vpop.permute.xlu0 %1878
  %v1881 = vmul.f32 %v1466, %v1819
  %v1882 = vmul.f32 %v1467, %v1823
  %v1883 = vmul.f32 %v1468, %v1827
  %v1884 = vmul.f32 %v1469, %v1831
  %v1885 = vmul.f32 %v1470, %v1835
  %v1886 = vmul.f32 %v1471, %v1839
  %v1887 = vmul.f32 %v1472, %v1843
  %v1888 = vmul.f32 %v1473, %v1847
  %v1889 = vmul.f32 %v1474, %v1851
  %v1890 = vmul.f32 %v1475, %v1855
  %v1891 = vmul.f32 %v1476, %v1859
  %v1892 = vmul.f32 %v1477, %v1863
  %v1893 = vmul.f32 %v1478, %v1867
  %v1894 = vmul.f32 %v1479, %v1871
  %v1895 = vmul.f32 %v1480, %v1875
  %v1896 = vmul.f32 %v1481, %v1879
  %v1897 = vmax.f32 %v1881, %v1885
  %v1898 = vmax.f32 %v1882, %v1886
  %v1899 = vmax.f32 %v1883, %v1887
  %v1900 = vmax.f32 %v1884, %v1888
  %v1901 = vmax.f32 %v1897, %v1889
  %v1902 = vmax.f32 %v1898, %v1890
  %v1903 = vmax.f32 %v1899, %v1891
  %v1904 = vmax.f32 %v1900, %v1892
  %v1905 = vmax.f32 %v1901, %v1893
  %v1906 = vmax.f32 %v1902, %v1894
  %v1907 = vmax.f32 %v1903, %v1895
  %v1908 = vmax.f32 %v1904, %v1896
  %v1909 = vmax.f32 %v1905, %v1906
  %v1910 = vmax.f32 %v1907, %v1908
  %v1911 = vmax.f32 %v1909, %v1910
  %v1912 = vrot.slane %v1911, 4
  %v1913 = vmax.f32 %v1911, %v1912
  %v1914 = vrot.slane %v1913, 2
  %v1915 = vmax.f32 %v1913, %v1914
  %v1916 = vrot.slane %v1915, 1
  %v1917 = vmax.f32 %v1915, %v1916
  %1918 = vset.pattern.permute.xlu0 4
  %1919 = vperm.xlu0 %1918, %v1482
  %v1920 = vpop.permute.xlu0 %1919
  %1922 = vset.pattern.permute.xlu0 4
  %1923 = vperm.xlu0 %1922, %v1483
  %v1924 = vpop.permute.xlu0 %1923
  %1926 = vset.pattern.permute.xlu0 4
  %1927 = vperm.xlu0 %1926, %v1484
  %v1928 = vpop.permute.xlu0 %1927
  %1930 = vset.pattern.permute.xlu0 4
  %1931 = vperm.xlu0 %1930, %v1485
  %v1932 = vpop.permute.xlu0 %1931
  %1934 = vset.pattern.permute.xlu0 4
  %1935 = vperm.xlu0 %1934, %v1486
  %v1936 = vpop.permute.xlu0 %1935
  %1938 = vset.pattern.permute.xlu0 4
  %1939 = vperm.xlu0 %1938, %v1487
  %v1940 = vpop.permute.xlu0 %1939
  %1942 = vset.pattern.permute.xlu0 4
  %1943 = vperm.xlu0 %1942, %v1488
  %v1944 = vpop.permute.xlu0 %1943
  %1946 = vset.pattern.permute.xlu0 4
  %1947 = vperm.xlu0 %1946, %v1489
  %v1948 = vpop.permute.xlu0 %1947
  %1950 = vset.pattern.permute.xlu0 4
  %1951 = vperm.xlu0 %1950, %v1490
  %v1952 = vpop.permute.xlu0 %1951
  %1954 = vset.pattern.permute.xlu0 4
  %1955 = vperm.xlu0 %1954, %v1491
  %v1956 = vpop.permute.xlu0 %1955
  %1958 = vset.pattern.permute.xlu0 4
  %1959 = vperm.xlu0 %1958, %v1492
  %v1960 = vpop.permute.xlu0 %1959
  %1962 = vset.pattern.permute.xlu0 4
  %1963 = vperm.xlu0 %1962, %v1493
  %v1964 = vpop.permute.xlu0 %1963
  %1966 = vset.pattern.permute.xlu0 4
  %1967 = vperm.xlu0 %1966, %v1494
  %v1968 = vpop.permute.xlu0 %1967
  %1970 = vset.pattern.permute.xlu0 4
  %1971 = vperm.xlu0 %1970, %v1495
  %v1972 = vpop.permute.xlu0 %1971
  %1974 = vset.pattern.permute.xlu0 4
  %1975 = vperm.xlu0 %1974, %v1496
  %v1976 = vpop.permute.xlu0 %1975
  %1978 = vset.pattern.permute.xlu0 4
  %1979 = vperm.xlu0 %1978, %v1497
  %v1980 = vpop.permute.xlu0 %1979
  %v1982 = vmul.f32 %v1466, %v1920
  %v1983 = vmul.f32 %v1467, %v1924
  %v1984 = vmul.f32 %v1468, %v1928
  %v1985 = vmul.f32 %v1469, %v1932
  %v1986 = vmul.f32 %v1470, %v1936
  %v1987 = vmul.f32 %v1471, %v1940
  %v1988 = vmul.f32 %v1472, %v1944
  %v1989 = vmul.f32 %v1473, %v1948
  %v1990 = vmul.f32 %v1474, %v1952
  %v1991 = vmul.f32 %v1475, %v1956
  %v1992 = vmul.f32 %v1476, %v1960
  %v1993 = vmul.f32 %v1477, %v1964
  %v1994 = vmul.f32 %v1478, %v1968
  %v1995 = vmul.f32 %v1479, %v1972
  %v1996 = vmul.f32 %v1480, %v1976
  %v1997 = vmul.f32 %v1481, %v1980
  %v1998 = vmax.f32 %v1982, %v1986
  %v1999 = vmax.f32 %v1983, %v1987
  %v2000 = vmax.f32 %v1984, %v1988
  %v2001 = vmax.f32 %v1985, %v1989
  %v2002 = vmax.f32 %v1998, %v1990
  %v2003 = vmax.f32 %v1999, %v1991
  %v2004 = vmax.f32 %v2000, %v1992
  %v2005 = vmax.f32 %v2001, %v1993
  %v2006 = vmax.f32 %v2002, %v1994
  %v2007 = vmax.f32 %v2003, %v1995
  %v2008 = vmax.f32 %v2004, %v1996
  %v2009 = vmax.f32 %v2005, %v1997
  %v2010 = vmax.f32 %v2006, %v2007
  %v2011 = vmax.f32 %v2008, %v2009
  %v2012 = vmax.f32 %v2010, %v2011
  %v2013 = vrot.slane %v2012, 4
  %v2014 = vmax.f32 %v2012, %v2013
  %v2015 = vrot.slane %v2014, 2
  %v2016 = vmax.f32 %v2014, %v2015
  %v2017 = vrot.slane %v2016, 1
  %v2018 = vmax.f32 %v2016, %v2017
  %2019 = vset.pattern.permute.xlu0 5
  %2020 = vperm.xlu0 %2019, %v1482
  %v2021 = vpop.permute.xlu0 %2020
  %2023 = vset.pattern.permute.xlu0 5
  %2024 = vperm.xlu0 %2023, %v1483
  %v2025 = vpop.permute.xlu0 %2024
  %2027 = vset.pattern.permute.xlu0 5
  %2028 = vperm.xlu0 %2027, %v1484
  %v2029 = vpop.permute.xlu0 %2028
  %2031 = vset.pattern.permute.xlu0 5
  %2032 = vperm.xlu0 %2031, %v1485
  %v2033 = vpop.permute.xlu0 %2032
  %2035 = vset.pattern.permute.xlu0 5
  %2036 = vperm.xlu0 %2035, %v1486
  %v2037 = vpop.permute.xlu0 %2036
  %2039 = vset.pattern.permute.xlu0 5
  %2040 = vperm.xlu0 %2039, %v1487
  %v2041 = vpop.permute.xlu0 %2040
  %2043 = vset.pattern.permute.xlu0 5
  %2044 = vperm.xlu0 %2043, %v1488
  %v2045 = vpop.permute.xlu0 %2044
  %2047 = vset.pattern.permute.xlu0 5
  %2048 = vperm.xlu0 %2047, %v1489
  %v2049 = vpop.permute.xlu0 %2048
  %2051 = vset.pattern.permute.xlu0 5
  %2052 = vperm.xlu0 %2051, %v1490
  %v2053 = vpop.permute.xlu0 %2052
  %2055 = vset.pattern.permute.xlu0 5
  %2056 = vperm.xlu0 %2055, %v1491
  %v2057 = vpop.permute.xlu0 %2056
  %2059 = vset.pattern.permute.xlu0 5
  %2060 = vperm.xlu0 %2059, %v1492
  %v2061 = vpop.permute.xlu0 %2060
  %2063 = vset.pattern.permute.xlu0 5
  %2064 = vperm.xlu0 %2063, %v1493
  %v2065 = vpop.permute.xlu0 %2064
  %2067 = vset.pattern.permute.xlu0 5
  %2068 = vperm.xlu0 %2067, %v1494
  %v2069 = vpop.permute.xlu0 %2068
  %2071 = vset.pattern.permute.xlu0 5
  %2072 = vperm.xlu0 %2071, %v1495
  %v2073 = vpop.permute.xlu0 %2072
  %2075 = vset.pattern.permute.xlu0 5
  %2076 = vperm.xlu0 %2075, %v1496
  %v2077 = vpop.permute.xlu0 %2076
  %2079 = vset.pattern.permute.xlu0 5
  %2080 = vperm.xlu0 %2079, %v1497
  %v2081 = vpop.permute.xlu0 %2080
  %v2083 = vmul.f32 %v1466, %v2021
  %v2084 = vmul.f32 %v1467, %v2025
  %v2085 = vmul.f32 %v1468, %v2029
  %v2086 = vmul.f32 %v1469, %v2033
  %v2087 = vmul.f32 %v1470, %v2037
  %v2088 = vmul.f32 %v1471, %v2041
  %v2089 = vmul.f32 %v1472, %v2045
  %v2090 = vmul.f32 %v1473, %v2049
  %v2091 = vmul.f32 %v1474, %v2053
  %v2092 = vmul.f32 %v1475, %v2057
  %v2093 = vmul.f32 %v1476, %v2061
  %v2094 = vmul.f32 %v1477, %v2065
  %v2095 = vmul.f32 %v1478, %v2069
  %v2096 = vmul.f32 %v1479, %v2073
  %v2097 = vmul.f32 %v1480, %v2077
  %v2098 = vmul.f32 %v1481, %v2081
  %v2099 = vmax.f32 %v2083, %v2087
  %v2100 = vmax.f32 %v2084, %v2088
  %v2101 = vmax.f32 %v2085, %v2089
  %v2102 = vmax.f32 %v2086, %v2090
  %v2103 = vmax.f32 %v2099, %v2091
  %v2104 = vmax.f32 %v2100, %v2092
  %v2105 = vmax.f32 %v2101, %v2093
  %v2106 = vmax.f32 %v2102, %v2094
  %v2107 = vmax.f32 %v2103, %v2095
  %v2108 = vmax.f32 %v2104, %v2096
  %v2109 = vmax.f32 %v2105, %v2097
  %v2110 = vmax.f32 %v2106, %v2098
  %v2111 = vmax.f32 %v2107, %v2108
  %v2112 = vmax.f32 %v2109, %v2110
  %v2113 = vmax.f32 %v2111, %v2112
  %v2114 = vrot.slane %v2113, 4
  %v2115 = vmax.f32 %v2113, %v2114
  %v2116 = vrot.slane %v2115, 2
  %v2117 = vmax.f32 %v2115, %v2116
  %v2118 = vrot.slane %v2117, 1
  %v2119 = vmax.f32 %v2117, %v2118
  %2120 = vset.pattern.permute.xlu0 6
  %2121 = vperm.xlu0 %2120, %v1482
  %v2122 = vpop.permute.xlu0 %2121
  %2124 = vset.pattern.permute.xlu0 6
  %2125 = vperm.xlu0 %2124, %v1483
  %v2126 = vpop.permute.xlu0 %2125
  %2128 = vset.pattern.permute.xlu0 6
  %2129 = vperm.xlu0 %2128, %v1484
  %v2130 = vpop.permute.xlu0 %2129
  %2132 = vset.pattern.permute.xlu0 6
  %2133 = vperm.xlu0 %2132, %v1485
  %v2134 = vpop.permute.xlu0 %2133
  %2136 = vset.pattern.permute.xlu0 6
  %2137 = vperm.xlu0 %2136, %v1486
  %v2138 = vpop.permute.xlu0 %2137
  %2140 = vset.pattern.permute.xlu0 6
  %2141 = vperm.xlu0 %2140, %v1487
  %v2142 = vpop.permute.xlu0 %2141
  %2144 = vset.pattern.permute.xlu0 6
  %2145 = vperm.xlu0 %2144, %v1488
  %v2146 = vpop.permute.xlu0 %2145
  %2148 = vset.pattern.permute.xlu0 6
  %2149 = vperm.xlu0 %2148, %v1489
  %v2150 = vpop.permute.xlu0 %2149
  %2152 = vset.pattern.permute.xlu0 6
  %2153 = vperm.xlu0 %2152, %v1490
  %v2154 = vpop.permute.xlu0 %2153
  %2156 = vset.pattern.permute.xlu0 6
  %2157 = vperm.xlu0 %2156, %v1491
  %v2158 = vpop.permute.xlu0 %2157
  %2160 = vset.pattern.permute.xlu0 6
  %2161 = vperm.xlu0 %2160, %v1492
  %v2162 = vpop.permute.xlu0 %2161
  %2164 = vset.pattern.permute.xlu0 6
  %2165 = vperm.xlu0 %2164, %v1493
  %v2166 = vpop.permute.xlu0 %2165
  %2168 = vset.pattern.permute.xlu0 6
  %2169 = vperm.xlu0 %2168, %v1494
  %v2170 = vpop.permute.xlu0 %2169
  %2172 = vset.pattern.permute.xlu0 6
  %2173 = vperm.xlu0 %2172, %v1495
  %v2174 = vpop.permute.xlu0 %2173
  %2176 = vset.pattern.permute.xlu0 6
  %2177 = vperm.xlu0 %2176, %v1496
  %v2178 = vpop.permute.xlu0 %2177
  %2180 = vset.pattern.permute.xlu0 6
  %2181 = vperm.xlu0 %2180, %v1497
  %v2182 = vpop.permute.xlu0 %2181
  %v2184 = vmul.f32 %v1466, %v2122
  %v2185 = vmul.f32 %v1467, %v2126
  %v2186 = vmul.f32 %v1468, %v2130
  %v2187 = vmul.f32 %v1469, %v2134
  %v2188 = vmul.f32 %v1470, %v2138
  %v2189 = vmul.f32 %v1471, %v2142
  %v2190 = vmul.f32 %v1472, %v2146
  %v2191 = vmul.f32 %v1473, %v2150
  %v2192 = vmul.f32 %v1474, %v2154
  %v2193 = vmul.f32 %v1475, %v2158
  %v2194 = vmul.f32 %v1476, %v2162
  %v2195 = vmul.f32 %v1477, %v2166
  %v2196 = vmul.f32 %v1478, %v2170
  %v2197 = vmul.f32 %v1479, %v2174
  %v2198 = vmul.f32 %v1480, %v2178
  %v2199 = vmul.f32 %v1481, %v2182
  %v2200 = vmax.f32 %v2184, %v2188
  %v2201 = vmax.f32 %v2185, %v2189
  %v2202 = vmax.f32 %v2186, %v2190
  %v2203 = vmax.f32 %v2187, %v2191
  %v2204 = vmax.f32 %v2200, %v2192
  %v2205 = vmax.f32 %v2201, %v2193
  %v2206 = vmax.f32 %v2202, %v2194
  %v2207 = vmax.f32 %v2203, %v2195
  %v2208 = vmax.f32 %v2204, %v2196
  %v2209 = vmax.f32 %v2205, %v2197
  %v2210 = vmax.f32 %v2206, %v2198
  %v2211 = vmax.f32 %v2207, %v2199
  %v2212 = vmax.f32 %v2208, %v2209
  %v2213 = vmax.f32 %v2210, %v2211
  %v2214 = vmax.f32 %v2212, %v2213
  %v2215 = vrot.slane %v2214, 4
  %v2216 = vmax.f32 %v2214, %v2215
  %v2217 = vrot.slane %v2216, 2
  %v2218 = vmax.f32 %v2216, %v2217
  %v2219 = vrot.slane %v2218, 1
  %v2220 = vmax.f32 %v2218, %v2219
  %2221 = vset.pattern.permute.xlu0 7
  %2222 = vperm.xlu0 %2221, %v1482
  %v2223 = vpop.permute.xlu0 %2222
  %2225 = vset.pattern.permute.xlu0 7
  %2226 = vperm.xlu0 %2225, %v1483
  %v2227 = vpop.permute.xlu0 %2226
  %2229 = vset.pattern.permute.xlu0 7
  %2230 = vperm.xlu0 %2229, %v1484
  %v2231 = vpop.permute.xlu0 %2230
  %2233 = vset.pattern.permute.xlu0 7
  %2234 = vperm.xlu0 %2233, %v1485
  %v2235 = vpop.permute.xlu0 %2234
  %2237 = vset.pattern.permute.xlu0 7
  %2238 = vperm.xlu0 %2237, %v1486
  %v2239 = vpop.permute.xlu0 %2238
  %2241 = vset.pattern.permute.xlu0 7
  %2242 = vperm.xlu0 %2241, %v1487
  %v2243 = vpop.permute.xlu0 %2242
  %2245 = vset.pattern.permute.xlu0 7
  %2246 = vperm.xlu0 %2245, %v1488
  %v2247 = vpop.permute.xlu0 %2246
  %2249 = vset.pattern.permute.xlu0 7
  %2250 = vperm.xlu0 %2249, %v1489
  %v2251 = vpop.permute.xlu0 %2250
  %2253 = vset.pattern.permute.xlu0 7
  %2254 = vperm.xlu0 %2253, %v1490
  %v2255 = vpop.permute.xlu0 %2254
  %2257 = vset.pattern.permute.xlu0 7
  %2258 = vperm.xlu0 %2257, %v1491
  %v2259 = vpop.permute.xlu0 %2258
  %2261 = vset.pattern.permute.xlu0 7
  %2262 = vperm.xlu0 %2261, %v1492
  %v2263 = vpop.permute.xlu0 %2262
  %2265 = vset.pattern.permute.xlu0 7
  %2266 = vperm.xlu0 %2265, %v1493
  %v2267 = vpop.permute.xlu0 %2266
  %2269 = vset.pattern.permute.xlu0 7
  %2270 = vperm.xlu0 %2269, %v1494
  %v2271 = vpop.permute.xlu0 %2270
  %2273 = vset.pattern.permute.xlu0 7
  %2274 = vperm.xlu0 %2273, %v1495
  %v2275 = vpop.permute.xlu0 %2274
  %2277 = vset.pattern.permute.xlu0 7
  %2278 = vperm.xlu0 %2277, %v1496
  %v2279 = vpop.permute.xlu0 %2278
  %2281 = vset.pattern.permute.xlu0 7
  %2282 = vperm.xlu0 %2281, %v1497
  %v2283 = vpop.permute.xlu0 %2282
  %v2285 = vmul.f32 %v1466, %v2223
  %v2286 = vmul.f32 %v1467, %v2227
  %v2287 = vmul.f32 %v1468, %v2231
  %v2288 = vmul.f32 %v1469, %v2235
  %v2289 = vmul.f32 %v1470, %v2239
  %v2290 = vmul.f32 %v1471, %v2243
  %v2291 = vmul.f32 %v1472, %v2247
  %v2292 = vmul.f32 %v1473, %v2251
  %v2293 = vmul.f32 %v1474, %v2255
  %v2294 = vmul.f32 %v1475, %v2259
  %v2295 = vmul.f32 %v1476, %v2263
  %v2296 = vmul.f32 %v1477, %v2267
  %v2297 = vmul.f32 %v1478, %v2271
  %v2298 = vmul.f32 %v1479, %v2275
  %v2299 = vmul.f32 %v1480, %v2279
  %v2300 = vmul.f32 %v1481, %v2283
  %v2301 = vmax.f32 %v2285, %v2289
  %v2302 = vmax.f32 %v2286, %v2290
  %v2303 = vmax.f32 %v2287, %v2291
  %v2304 = vmax.f32 %v2288, %v2292
  %v2305 = vmax.f32 %v2301, %v2293
  %v2306 = vmax.f32 %v2302, %v2294
  %v2307 = vmax.f32 %v2303, %v2295
  %v2308 = vmax.f32 %v2304, %v2296
  %v2309 = vmax.f32 %v2305, %v2297
  %v2310 = vmax.f32 %v2306, %v2298
  %v2311 = vmax.f32 %v2307, %v2299
  %v2312 = vmax.f32 %v2308, %v2300
  %v2313 = vmax.f32 %v2309, %v2310
  %v2314 = vmax.f32 %v2311, %v2312
  %v2315 = vmax.f32 %v2313, %v2314
  %v2316 = vrot.slane %v2315, 4
  %v2317 = vmax.f32 %v2315, %v2316
  %v2318 = vrot.slane %v2317, 2
  %v2319 = vmax.f32 %v2317, %v2318
  %v2320 = vrot.slane %v2319, 1
  %v2321 = vmax.f32 %v2319, %v2320
  %vm2322 = vcmask 1040384
  %v2323 = vsel %vm2322, %v1614, %v1715
  %vm2324 = vcmask 1041408
  %v2325 = vsel %vm2324, %v2323, %v1816
  %vm2326 = vcmask 1042432
  %v2327 = vsel %vm2326, %v2325, %v1917
  %vm2328 = vcmask 1043456
  %v2329 = vsel %vm2328, %v2327, %v2018
  %vm2330 = vcmask 1044480
  %v2331 = vsel %vm2330, %v2329, %v2119
  %vm2332 = vcmask 1045504
  %v2333 = vsel %vm2332, %v2331, %v2220
  %vm2334 = vcmask 1046528
  %v2335 = vsel %vm2334, %v2333, %v2321
  %2336 = vst [vmem:[#allocation4] sm:$0xff] %v2335
  %v2337 = vld [vmem:[#allocation4] sm:$0xff]
  %v2338 = vld [vmem:[%s7] sm:$0xff]
  %v2339 = vld [vmem:[%s7 + $0x8] sm:$0xff]
  %v2340 = vld [vmem:[%s7 + $0x10] sm:$0xff]
  %v2341 = vld [vmem:[%s7 + $0x18] sm:$0xff]
  %v2342 = vld [vmem:[%s7 + $0x20] sm:$0xff]
  %v2343 = vld [vmem:[%s7 + $0x28] sm:$0xff]
  %v2344 = vld [vmem:[%s7 + $0x30] sm:$0xff]
  %v2345 = vld [vmem:[%s7 + $0x38] sm:$0xff]
  %v2346 = vld [vmem:[%s7 + $0x40] sm:$0xff]
  %v2347 = vld [vmem:[%s7 + $0x48] sm:$0xff]
  %v2348 = vld [vmem:[%s7 + $0x50] sm:$0xff]
  %v2349 = vld [vmem:[%s7 + $0x58] sm:$0xff]
  %v2350 = vld [vmem:[%s7 + $0x60] sm:$0xff]
  %v2351 = vld [vmem:[%s7 + $0x68] sm:$0xff]
  %v2352 = vld [vmem:[%s7 + $0x70] sm:$0xff]
  %v2353 = vld [vmem:[%s7 + $0x78] sm:$0xff]
  %2354 = vmatprep.subr.mxu0 0.0
  %2355 = vmatpush1.msra.mxu0 %v2338
  %2356 = vmatprep.subr.mxu0 0.0
  %2357 = vmatpush1.msra.mxu0 %v2339
  %2358 = vmatprep.subr.mxu0 0.0
  %2359 = vmatpush1.msra.mxu0 %v2340
  %2360 = vmatprep.subr.mxu0 0.0
  %2361 = vmatpush1.msra.mxu0 %v2341
  %2362 = vmatprep.subr.mxu0 0.0
  %2363 = vmatpush1.msra.mxu0 %v2342
  %2364 = vmatprep.subr.mxu0 0.0
  %2365 = vmatpush1.msra.mxu0 %v2343
  %2366 = vmatprep.subr.mxu0 0.0
  %2367 = vmatpush1.msra.mxu0 %v2344
  %2368 = vmatprep.subr.mxu0 0.0
  %2369 = vmatpush1.msra.mxu0 %v2345
  %2370 = vmatprep.subr.mxu0 0.0
  %2371 = vmatpush1.msra.mxu0 %v2346
  %2372 = vmatprep.subr.mxu0 0.0
  %2373 = vmatpush1.msra.mxu0 %v2347
  %2374 = vmatprep.subr.mxu0 0.0
  %2375 = vmatpush1.msra.mxu0 %v2348
  %2376 = vmatprep.subr.mxu0 0.0
  %2377 = vmatpush1.msra.mxu0 %v2349
  %2378 = vmatprep.subr.mxu0 0.0
  %2379 = vmatpush1.msra.mxu0 %v2350
  %2380 = vmatprep.subr.mxu0 0.0
  %2381 = vmatpush1.msra.mxu0 %v2351
  %2382 = vmatprep.subr.mxu0 0.0
  %2383 = vmatpush1.msra.mxu0 %v2352
  %2384 = vmatprep.subr.mxu0 0.0
  %2385 = vmatpush1.msra.mxu0 %v2353
  %2386 = vmatprep.subr.mxu0 0.0
  %2387 = vmatpush1.msra.mxu0 0.0
  %2388 = vmatprep.subr.mxu0 0.0
  %2389 = vmatpush1.msra.mxu0 0.0
  %2390 = vmatprep.subr.mxu0 0.0
  %2391 = vmatpush1.msra.mxu0 0.0
  %2392 = vmatprep.subr.mxu0 0.0
  %2393 = vmatpush1.msra.mxu0 0.0
  %2394 = vmatprep.subr.mxu0 0.0
  %2395 = vmatpush1.msra.mxu0 0.0
  %2396 = vmatprep.subr.mxu0 0.0
  %2397 = vmatpush1.msra.mxu0 0.0
  %2398 = vmatprep.subr.mxu0 0.0
  %2399 = vmatpush1.msra.mxu0 0.0
  %2400 = vmatprep.subr.mxu0 0.0
  %2401 = vmatpush1.msra.mxu0 0.0
  %2402 = vmatprep.subr.mxu0 0.0
  %2403 = vmatpush1.msra.mxu0 0.0
  %2404 = vmatprep.subr.mxu0 0.0
  %2405 = vmatpush1.msra.mxu0 0.0
  %2406 = vmatprep.subr.mxu0 0.0
  %2407 = vmatpush1.msra.mxu0 0.0
  %2408 = vmatprep.subr.mxu0 0.0
  %2409 = vmatpush1.msra.mxu0 0.0
  %2410 = vmatprep.subr.mxu0 0.0
  %2411 = vmatpush1.msra.mxu0 0.0
  %2412 = vmatprep.subr.mxu0 0.0
  %2413 = vmatpush1.msra.mxu0 0.0
  %2414 = vmatprep.subr.mxu0 0.0
  %2415 = vmatpush1.msra.mxu0 0.0
  %2416 = vmatprep.subr.mxu0 0.0
  %2417 = vmatpush1.msra.mxu0 0.0
  %2418 = vmatprep.mubr.f32.mxu0 0.0
  %2419 = vmatmul.mubr.f32.gmra.mrb[0].mxu0 %v2337
  %v2420 = vpop.f32.mrb[0].mxu0
  %v2421 = vadd.f32 0.0, %v2420
  %v2422 = vpop.f32.mrb[0].mxu0
  %2423 = vdwg.mxu0
  %2424 = vst [vmem:[%s8] sm:$0xff] %v2421
  // Predicated region
  $region64: #{sagenet2_forward.1} parent=0 // pred_check
    _
  $region65: #{sagenet2_forward.1} parent=0 // pred_check_branch
    %2426 = sbr.rel (0) target = $region67
  $region66: #{sagenet2_forward.1} parent=0 // pred_region
    _
  $region67: #{sagenet2_forward.1} parent=0 // pred_fallthru
    _
  // Predicated region
  $region68: #{sagenet2_forward.1} parent=0 // pred_check
    _
  $region69: #{sagenet2_forward.1} parent=0 // pred_check_branch
    %2428 = sbr.rel (0) target = $region71
  $region70: #{sagenet2_forward.1} parent=0 // pred_region
    _
  $region71: #{sagenet2_forward.1} parent=0 // pred_fallthru
    _
  %2429 = vsyncmov [#allocation3]
  %s2430 = vpop.sfrf %2429
  %p2431 = scmp.eq.s32.totalorder %s2430, 0
  %p2432 = pneg %p2431
  %2434 = shalt.err (%p2432)

</llo_original>
